<compile_context>
chip_gen: v7x
topology: tpu7x:2x2x1
jax: 0.10.0
libtpu: 0.0.40
codegen_flags: <defaults>
</compile_context>

<pallas_src>
from functools import partial

import jax
import jax.numpy as jnp
from jax.experimental import pallas as pl
from jax.experimental.pallas import tpu as pltpu

_LANE = 128
# Explicit scoped-VMEM cap: v5e's default is only 16 MiB; 32 MiB is safe on
# every generation (v7x physical VMEM is 64 MiB) and leaves ample headroom.
_VMEM_LIMIT = 32 * 1024 * 1024


# ---------------------------------------------------------------------------
# Fused kernel: entire forward in one pallas_call (A_hat resident in VMEM).
#   h1 = relu(A @ X  @ W1 + b1)
#   h2 = relu(A @ h1 @ W2 + b2)
#   h3 =      A @ h2 @ W3 + b3
#   out = (pool @ h3) @ Wl + bl        (dropout is eval-mode identity)
# ---------------------------------------------------------------------------
def _gcn_fused_kernel(adj_ref, x_ref, pool_ref, wb1_ref, wb2_ref, wb3_ref,
                      wbl_ref, out_ref, *, f_in, hidden):
    a = adj_ref[...]  # (N, N) bf16, VMEM-resident, read from HBM once

    def conv(h_bf, wb_ref, fin, relu):
        # A @ h on the MXU in bf16 with f32 accumulation, then the tiny
        # (fin x fout) weight matmul + bias in f32.
        agg = jnp.dot(a, h_bf, preferred_element_type=jnp.float32)
        w = wb_ref[0:fin, :]
        b = wb_ref[fin:fin + 1, :]
        y = jnp.dot(agg, w, preferred_element_type=jnp.float32) + b
        if relu:
            y = jnp.maximum(y, 0.0)
        return y

    h = conv(x_ref[...], wb1_ref, f_in, True)
    h = conv(h.astype(jnp.bfloat16), wb2_ref, hidden, True)
    h = conv(h.astype(jnp.bfloat16), wb3_ref, hidden, False)

    # TODO(synk): dropout(p=0.5) is training-only; eval-mode identity here.
    pooled = jnp.dot(pool_ref[...], h.astype(jnp.bfloat16),
                     preferred_element_type=jnp.float32)        # (G, hidden)
    wl = wbl_ref[0:hidden, :]
    bl = wbl_ref[hidden:hidden + 1, :]
    out_ref[...] = (jnp.dot(pooled, wl, preferred_element_type=jnp.float32)
                    + bl).astype(out_ref.dtype)


def _gcn_fused(adj_bf, x_bf, pool_bf, wb1, wb2, wb3, wbl):
    n_pad = adj_bf.shape[0]
    f_in = x_bf.shape[1]
    hidden = wb1.shape[1]
    g = pool_bf.shape[0]
    c = wbl.shape[1]
    kernel = partial(_gcn_fused_kernel, f_in=f_in, hidden=hidden)

    def _full(shape):
        return pl.BlockSpec(shape, lambda i: (0,) * len(shape))

    return pl.pallas_call(
        kernel,
        out_shape=jax.ShapeDtypeStruct((g, c), jnp.float32),
        grid_spec=pltpu.PrefetchScalarGridSpec(
            num_scalar_prefetch=0,
            grid=(1,),
            in_specs=[
                _full((n_pad, n_pad)),        # A_hat (bf16)
                _full((n_pad, f_in)),         # X     (bf16)
                _full((g, n_pad)),            # pool  (bf16)
                _full((f_in + 1, hidden)),    # W1|b1 (f32)
                _full((hidden + 1, hidden)),  # W2|b2
                _full((hidden + 1, hidden)),  # W3|b3
                _full((hidden + 1, c)),       # Wl|bl
            ],
            out_specs=_full((g, c)),
        ),
        compiler_params=pltpu.CompilerParams(
            dimension_semantics=("arbitrary",),
            vmem_limit_bytes=_VMEM_LIMIT,
        ),
    )(adj_bf, x_bf, pool_bf, wb1, wb2, wb3, wbl)


# ---------------------------------------------------------------------------
# Tiled path (large graphs): one GCNConv layer per pallas_call.
#   grid = (row tiles tm ["parallel" -> megacore], adj-column tiles tk
#           ["arbitrary" reduction]); f32 accumulator at width F_in;
#   W, b (+ReLU) applied once per row tile at the final reduction step.
# ---------------------------------------------------------------------------
def _gcn_conv_kernel(adj_ref, h_ref, wb_ref, out_ref, acc_ref, *,
                     fin, apply_relu):
    k = pl.program_id(1)

    @pl.when(k == 0)
    def _init():
        acc_ref[...] = jnp.zeros_like(acc_ref)

    acc_ref[...] += jnp.dot(adj_ref[...], h_ref[...],
                            preferred_element_type=jnp.float32)

    @pl.when(k == pl.num_programs(1) - 1)
    def _finalize():
        w = wb_ref[0:fin, :]           # (fin, fout) f32
        b = wb_ref[fin:fin + 1, :]     # (1,   fout) f32
        y = jnp.dot(acc_ref[...], w, preferred_element_type=jnp.float32) + b
        if apply_relu:
            y = jnp.maximum(y, 0.0)
        out_ref[...] = y.astype(out_ref.dtype)


def _gcn_conv_layer(adj_bf, h_bf, wb, *, tm, tk, apply_relu):
    n_pad = adj_bf.shape[0]
    fin = h_bf.shape[1]
    fout = wb.shape[1]
    kernel = partial(_gcn_conv_kernel, fin=fin, apply_relu=apply_relu)
    # For v7x megacore, prefer tm such that n_pad // tm >= 2 (both TCs busy).
    return pl.pallas_call(
        kernel,
        out_shape=jax.ShapeDtypeStruct((n_pad, fout), jnp.bfloat16),
        grid_spec=pltpu.PrefetchScalarGridSpec(
            num_scalar_prefetch=0,
            grid=(n_pad // tm, n_pad // tk),
            in_specs=[
                pl.BlockSpec((tm, tk), lambda i, k: (i, k)),          # A_hat
                pl.BlockSpec((tk, fin), lambda i, k: (k, 0)),         # H rows
                pl.BlockSpec((fin + 1, fout), lambda i, k: (0, 0)),   # W|b
            ],
            out_specs=pl.BlockSpec((tm, fout), lambda i, k: (i, 0)),
            scratch_shapes=[pltpu.VMEM((tm, fin), jnp.float32)],
        ),
        compiler_params=pltpu.CompilerParams(
            dimension_semantics=("parallel", "arbitrary"),
            vmem_limit_bytes=_VMEM_LIMIT,
        ),
    )(adj_bf, h_bf, wb)


def _pool_head_kernel(pool_ref, h_ref, wb_ref, out_ref, acc_ref, *, hidden):
    k = pl.program_id(0)

    @pl.when(k == 0)
    def _init():
        acc_ref[...] = jnp.zeros_like(acc_ref)

    acc_ref[...] += jnp.dot(pool_ref[...], h_ref[...],
                            preferred_element_type=jnp.float32)

    @pl.when(k == pl.num_programs(0) - 1)
    def _finalize():
        # TODO(synk): dropout(p=0.5) is training-only; eval-mode identity.
        w = wb_ref[0:hidden, :]
        b = wb_ref[hidden:hidden + 1, :]
        out_ref[...] = (jnp.dot(acc_ref[...], w,
                                preferred_element_type=jnp.float32)
                        + b).astype(out_ref.dtype)


def _pool_head(pool_bf, h_bf, wbl, *, tk):
    g, n_pad = pool_bf.shape
    hidden = h_bf.shape[1]
    c = wbl.shape[1]
    kernel = partial(_pool_head_kernel, hidden=hidden)
    return pl.pallas_call(
        kernel,
        out_shape=jax.ShapeDtypeStruct((g, c), jnp.float32),
        grid_spec=pltpu.PrefetchScalarGridSpec(
            num_scalar_prefetch=0,
            grid=(n_pad // tk,),
            in_specs=[
                pl.BlockSpec((g, tk), lambda k: (0, k)),              # pool
                pl.BlockSpec((tk, hidden), lambda k: (k, 0)),         # H rows
                pl.BlockSpec((hidden + 1, c), lambda k: (0, 0)),      # W|b
            ],
            out_specs=pl.BlockSpec((g, c), lambda k: (0, 0)),
            scratch_shapes=[pltpu.VMEM((g, hidden), jnp.float32)],
        ),
        compiler_params=pltpu.CompilerParams(
            dimension_semantics=("arbitrary",),
            vmem_limit_bytes=_VMEM_LIMIT,
        ),
    )(pool_bf, h_bf, wbl)


# ---------------------------------------------------------------------------
# Full forward
# ---------------------------------------------------------------------------
def _tile(n, target):
    """Largest multiple of 128 that is <= target and divides n (n % 128 == 0)."""
    t = max(_LANE, min(target, n))
    t = (t // _LANE) * _LANE
    while n % t:
        t -= _LANE
    return t


def gcn_forward(adj, x, pool, w1, b1, w2, b2, w3, b3, wl, bl, *,
                tm=256, tk=1024, fuse_vmem_budget=20 * 1024 * 1024):
    """GCN forward.

    Prefer passing adj / pool already node-padded to a multiple of 128 and in
    bf16 (see build_normalized_adj / build_pool_matrix) so no extra full-N^2
    pad/cast HBM passes happen here.

    If the padded A_hat fits the fused-VMEM budget, the whole forward runs as
    one pallas_call with A_hat resident in VMEM (read from HBM once).
    Otherwise a per-layer pipelined path runs; tiles default to tm=256 rows x
    tk=1024 adjacency columns (~1 MiB double-buffered bf16) — VMEM is plentiful
    on every generation (v5e/v6e 128 MiB, v7x 64 MiB), so tm=512 / tk=2048 is
    also fine and larger tiles get closer to the HBM roofline.
    """
    n = x.shape[0]
    assert adj.shape == (n, n) and pool.shape[1] == n

    # Pad the node dimension to a multiple of 128.  Zero adjacency rows/cols
    # and zero pool columns make the padding an exact no-op for the math.
    n_pad = -(-n // _LANE) * _LANE
    pad = n_pad - n
    if pad:  # avoided entirely when inputs are built pre-padded upstream
        adj = jnp.pad(adj, ((0, pad), (0, pad)))
        x = jnp.pad(x, ((0, pad), (0, 0)))
        pool = jnp.pad(pool, ((0, 0), (0, pad)))

    # bf16 streams for the bandwidth-bound A_hat / pool matmuls (f32 accum);
    # no-ops when the caller already provides bf16.
    adj_bf = adj if adj.dtype == jnp.bfloat16 else adj.astype(jnp.bfloat16)
    x_bf = x if x.dtype == jnp.bfloat16 else x.astype(jnp.bfloat16)
    pool_bf = pool if pool.dtype == jnp.bfloat16 else pool.astype(jnp.bfloat16)

    # Pack each layer's (W, b) into one small f32 operand (fewer tiny DMAs).
    wb1 = jnp.concatenate([w1, b1.reshape(1, -1)], axis=0).astype(jnp.float32)
    wb2 = jnp.concatenate([w2, b2.reshape(1, -1)], axis=0).astype(jnp.float32)
    wb3 = jnp.concatenate([w3, b3.reshape(1, -1)], axis=0).astype(jnp.float32)
    wbl = jnp.concatenate([wl, bl.reshape(1, -1)], axis=0).astype(jnp.float32)

    f_in = x.shape[1]
    hidden = w1.shape[1]
    g = pool.shape[0]

    # Rough VMEM footprint of the fused path (x2 for Pallas' default input
    # double-buffering, plus the live f32 intermediates).
    fused_bytes = (2 * (n_pad * n_pad + g * n_pad + n_pad * f_in) * 2
                   + n_pad * (f_in + 3 * hidden) * 4)
    if fused_bytes <= fuse_vmem_budget:
        return _gcn_fused(adj_bf, x_bf, pool_bf, wb1, wb2, wb3, wbl)

    # Tiled / pipelined fall-back for graphs whose A_hat exceeds VMEM.
    tm_ = _tile(n_pad, tm)
    tk_ = _tile(n_pad, tk)
    h = _gcn_conv_layer(adj_bf, x_bf, wb1, tm=tm_, tk=tk_, apply_relu=True)
    h = _gcn_conv_layer(adj_bf, h, wb2, tm=tm_, tk=tk_, apply_relu=True)
    h = _gcn_conv_layer(adj_bf, h, wb3, tm=tm_, tk=tk_, apply_relu=False)
    return _pool_head(pool_bf, h, wbl, tk=tk_)


# ---------------- JAX glue: graph preprocessing + deterministic params -------
def build_normalized_adj(edge_index, num_nodes, *, n_pad=None,
                         dtype=jnp.float32):
    """Dense A_hat = D^{-1/2} (A + I) D^{-1/2} from a (2, E) edge_index,
    emitted already node-padded to n_pad and in `dtype` (so the kernel wrapper
    never re-pads or re-casts the N^2 array)."""
    if n_pad is None:
        n_pad = num_nodes
    src, dst = edge_index[0], edge_index[1]
    a = jnp.zeros((n_pad, n_pad), jnp.float32)
    a = a.at[dst, src].set(1.0)
    idx = jnp.arange(num_nodes)
    a = a.at[idx, idx].add(1.0)              # self loops on real nodes only
    deg = a.sum(axis=1)
    d_inv_sqrt = jnp.where(deg > 0, 1.0 / jnp.sqrt(deg), 0.0)
    return (d_inv_sqrt[:, None] * a * d_inv_sqrt[None, :]).astype(dtype)


def build_pool_matrix(batch, num_graphs, *, n_pad=None, dtype=jnp.float32):
    """pool[g, n] = 1/count_g if batch[n] == g else 0 (zero-padded columns)."""
    n = batch.shape[0]
    if n_pad is None:
        n_pad = n
    onehot = (batch[None, :] == jnp.arange(num_graphs)[:, None]).astype(jnp.float32)
    counts = jnp.maximum(onehot.sum(axis=1, keepdims=True), 1.0)
    pool = onehot / counts
    if n_pad > n:
        pool = jnp.pad(pool, ((0, 0), (0, n_pad - n)))
    return pool.astype(dtype)


def glorot(key, shape):
    fan_in, fan_out = shape
    limit = jnp.sqrt(6.0 / (fan_in + fan_out))
    return jax.random.uniform(key, shape, jnp.float32, -limit, limit)


if __name__ == "__main__":
    # 8 graphs x 24 nodes = 192 nodes (pads to 256); 4 node features,
    # hidden=32, 4 classes.
    NUM_GRAPHS = 8
    NODES_PER_GRAPH = 24
    NUM_NODES = NUM_GRAPHS * NODES_PER_GRAPH
    NUM_FEATURES = 4
    HIDDEN = 32
    NUM_CLASSES = 4

    key = jax.random.PRNGKey(0)
    kx, k1, k2, k3, kl, kbl = jax.random.split(key, 6)

    x = jax.random.normal(kx, (NUM_NODES, NUM_FEATURES), jnp.float32)

    # deterministic undirected ring inside each graph of the batch
    src_list, dst_list = [], []
    for gi in range(NUM_GRAPHS):
        base = gi * NODES_PER_GRAPH
        for i in range(NODES_PER_GRAPH):
            a_node = base + i
            b_node = base + (i + 1) % NODES_PER_GRAPH
            src_list += [a_node, b_node]
            dst_list += [b_node, a_node]
    edge_index = jnp.array([src_list, dst_list], dtype=jnp.int32)
    batch = jnp.repeat(jnp.arange(NUM_GRAPHS, dtype=jnp.int32), NODES_PER_GRAPH)

    # Kernel inputs are built pre-padded (multiple of 128) and pre-cast to
    # bf16 so the forward wrapper adds no extra N^2 HBM passes.
    N_PAD = -(-NUM_NODES // _LANE) * _LANE
    adj_bf = build_normalized_adj(edge_index, NUM_NODES, n_pad=N_PAD,
                                  dtype=jnp.bfloat16)
    pool_bf = build_pool_matrix(batch, NUM_GRAPHS, n_pad=N_PAD,
                                dtype=jnp.bfloat16)
    x_pad = jnp.pad(x, ((0, N_PAD - NUM_NODES), (0, 0)))

    # deterministic params (GCNConv: glorot weight, zero bias; Linear: uniform bias)
    w1 = glorot(k1, (NUM_FEATURES, HIDDEN)); b1 = jnp.zeros((1, HIDDEN), jnp.float32)
    w2 = glorot(k2, (HIDDEN, HIDDEN));       b2 = jnp.zeros((1, HIDDEN), jnp.float32)
    w3 = glorot(k3, (HIDDEN, HIDDEN));       b3 = jnp.zeros((1, HIDDEN), jnp.float32)
    wl = glorot(kl, (HIDDEN, NUM_CLASSES))
    bl = jax.random.uniform(kbl, (1, NUM_CLASSES), jnp.float32,
                            -1.0 / jnp.sqrt(HIDDEN), 1.0 / jnp.sqrt(HIDDEN))
    params = (w1, b1, w2, b2, w3, b3, wl, bl)

    # Fused single-call path (A_hat resident in VMEM) — the default here.
    out_fused = jax.block_until_ready(gcn_forward(adj_bf, x_pad, pool_bf, *params))

    # Tiled / pipelined path (forced), with small tiles so the multi-step
    # accumulation + finalize logic is exercised too.
    out_tiled = jax.block_until_ready(
        gcn_forward(adj_bf, x_pad, pool_bf, *params,
                    tm=128, tk=128, fuse_vmem_budget=0))

    # pure-JAX f32 reference (kernels use bf16 adj/h/pool -> loosened tolerance)
    adj_f32 = build_normalized_adj(edge_index, NUM_NODES)
    pool_f32 = build_pool_matrix(batch, NUM_GRAPHS)
    h = jnp.maximum(adj_f32 @ (x @ w1) + b1, 0.0)
    h = jnp.maximum(adj_f32 @ (h @ w2) + b2, 0.0)
    h = adj_f32 @ (h @ w3) + b3
    ref = (pool_f32 @ h) @ wl + bl

    assert out_fused.shape == (NUM_GRAPHS, NUM_CLASSES)
    assert out_tiled.shape == (NUM_GRAPHS, NUM_CLASSES)
    assert jnp.allclose(out_fused, ref, atol=3e-2, rtol=3e-2), \
        float(jnp.max(jnp.abs(out_fused - ref)))
    assert jnp.allclose(out_tiled, ref, atol=3e-2, rtol=3e-2), \
        float(jnp.max(jnp.abs(out_tiled - ref)))

    print("KERNEL_OK")
</pallas_src>

<mosaic_0001>
module attributes {stable_mosaic.version = 11 : i64} {
  func.func @_gcn_fused_kernel(%arg0: i32, %arg1: memref<256x256xbf16, #tpu.memory_space<vmem>>, %arg2: memref<256x4xbf16, #tpu.memory_space<vmem>>, %arg3: memref<8x256xbf16, #tpu.memory_space<vmem>>, %arg4: memref<5x32xf32, #tpu.memory_space<vmem>>, %arg5: memref<33x32xf32, #tpu.memory_space<vmem>>, %arg6: memref<33x32xf32, #tpu.memory_space<vmem>>, %arg7: memref<33x4xf32, #tpu.memory_space<vmem>>, %arg8: memref<8x4xf32, #tpu.memory_space<vmem>>) attributes {dimension_semantics = [#tpu.dimension_semantics<arbitrary>], iteration_bounds = array<i64: 1>, scalar_prefetch = 0 : i64, scratch_operands = 0 : i64, tpu.core_type = #tpu.core_type<tc>, window_params = [{pipeline_mode = #tpu.pipeline_mode<synchronous>, transform_indices = @transform_0, window_bounds = array<i64: 256, 256>}, {pipeline_mode = #tpu.pipeline_mode<synchronous>, transform_indices = @transform_1, window_bounds = array<i64: 256, 4>}, {pipeline_mode = #tpu.pipeline_mode<synchronous>, transform_indices = @transform_2, window_bounds = array<i64: 8, 256>}, {pipeline_mode = #tpu.pipeline_mode<synchronous>, transform_indices = @transform_3, window_bounds = array<i64: 5, 32>}, {pipeline_mode = #tpu.pipeline_mode<synchronous>, transform_indices = @transform_4, window_bounds = array<i64: 33, 32>}, {pipeline_mode = #tpu.pipeline_mode<synchronous>, transform_indices = @transform_5, window_bounds = array<i64: 33, 32>}, {pipeline_mode = #tpu.pipeline_mode<synchronous>, transform_indices = @transform_6, window_bounds = array<i64: 33, 4>}, {pipeline_mode = #tpu.pipeline_mode<synchronous>, transform_indices = @transform_7, window_bounds = array<i64: 8, 4>}]} {
    %c0 = arith.constant 0 : index
    %c0_0 = arith.constant 0 : index
    %0 = vector.load %arg1[%c0, %c0_0] : memref<256x256xbf16, #tpu.memory_space<vmem>>, vector<256x256xbf16>
    %c0_1 = arith.constant 0 : index
    %c0_2 = arith.constant 0 : index
    %1 = vector.load %arg2[%c0_1, %c0_2] : memref<256x4xbf16, #tpu.memory_space<vmem>>, vector<256x4xbf16>
    %cst = arith.constant dense<0.000000e+00> : vector<256x4xf32>
    %2 = tpu.matmul %0, %1, %cst {dimension_numbers = #tpu.dot_dimension_numbers<[1], [0], [0], [1], [0, 0, 1, 1], [], []>} : vector<256x256xbf16>, vector<256x4xbf16>, vector<256x4xf32> -> vector<256x4xf32>
    %c0_3 = arith.constant 0 : index
    %c0_4 = arith.constant 0 : index
    %3 = vector.load %arg4[%c0_3, %c0_4] : memref<5x32xf32, #tpu.memory_space<vmem>>, vector<4x32xf32>
    %c4 = arith.constant 4 : index
    %c0_5 = arith.constant 0 : index
    %4 = vector.load %arg4[%c4, %c0_5] : memref<5x32xf32, #tpu.memory_space<vmem>>, vector<1x32xf32>
    %cst_6 = arith.constant dense<0.000000e+00> : vector<256x32xf32>
    %5 = tpu.matmul %2, %3, %cst_6 {dimension_numbers = #tpu.dot_dimension_numbers<[1], [0], [0], [1], [0, 0, 1, 1], [], []>} : vector<256x4xf32>, vector<4x32xf32>, vector<256x32xf32> -> vector<256x32xf32>
    %6 = vector.broadcast %4 : vector<1x32xf32> to vector<256x32xf32>
    %7 = arith.addf %5, %6 : vector<256x32xf32>
    %cst_7 = arith.constant 0.000000e+00 : f32
    %8 = vector.broadcast %cst_7 : f32 to vector<256x32xf32>
    %9 = arith.maximumf %7, %8 : vector<256x32xf32>
    %10 = arith.truncf %9 : vector<256x32xf32> to vector<256x32xbf16>
    %cst_8 = arith.constant dense<0.000000e+00> : vector<256x32xf32>
    %11 = tpu.matmul %0, %10, %cst_8 {dimension_numbers = #tpu.dot_dimension_numbers<[1], [0], [0], [1], [0, 0, 1, 1], [], []>} : vector<256x256xbf16>, vector<256x32xbf16>, vector<256x32xf32> -> vector<256x32xf32>
    %c0_9 = arith.constant 0 : index
    %c0_10 = arith.constant 0 : index
    %12 = vector.load %arg5[%c0_9, %c0_10] : memref<33x32xf32, #tpu.memory_space<vmem>>, vector<32x32xf32>
    %c32 = arith.constant 32 : index
    %c0_11 = arith.constant 0 : index
    %13 = vector.load %arg5[%c32, %c0_11] : memref<33x32xf32, #tpu.memory_space<vmem>>, vector<1x32xf32>
    %cst_12 = arith.constant dense<0.000000e+00> : vector<256x32xf32>
    %14 = tpu.matmul %11, %12, %cst_12 {dimension_numbers = #tpu.dot_dimension_numbers<[1], [0], [0], [1], [0, 0, 1, 1], [], []>} : vector<256x32xf32>, vector<32x32xf32>, vector<256x32xf32> -> vector<256x32xf32>
    %15 = vector.broadcast %13 : vector<1x32xf32> to vector<256x32xf32>
    %16 = arith.addf %14, %15 : vector<256x32xf32>
    %cst_13 = arith.constant 0.000000e+00 : f32
    %17 = vector.broadcast %cst_13 : f32 to vector<256x32xf32>
    %18 = arith.maximumf %16, %17 : vector<256x32xf32>
    %19 = arith.truncf %18 : vector<256x32xf32> to vector<256x32xbf16>
    %cst_14 = arith.constant dense<0.000000e+00> : vector<256x32xf32>
    %20 = tpu.matmul %0, %19, %cst_14 {dimension_numbers = #tpu.dot_dimension_numbers<[1], [0], [0], [1], [0, 0, 1, 1], [], []>} : vector<256x256xbf16>, vector<256x32xbf16>, vector<256x32xf32> -> vector<256x32xf32>
    %c0_15 = arith.constant 0 : index
    %c0_16 = arith.constant 0 : index
    %21 = vector.load %arg6[%c0_15, %c0_16] : memref<33x32xf32, #tpu.memory_space<vmem>>, vector<32x32xf32>
    %c32_17 = arith.constant 32 : index
    %c0_18 = arith.constant 0 : index
    %22 = vector.load %arg6[%c32_17, %c0_18] : memref<33x32xf32, #tpu.memory_space<vmem>>, vector<1x32xf32>
    %cst_19 = arith.constant dense<0.000000e+00> : vector<256x32xf32>
    %23 = tpu.matmul %20, %21, %cst_19 {dimension_numbers = #tpu.dot_dimension_numbers<[1], [0], [0], [1], [0, 0, 1, 1], [], []>} : vector<256x32xf32>, vector<32x32xf32>, vector<256x32xf32> -> vector<256x32xf32>
    %24 = vector.broadcast %22 : vector<1x32xf32> to vector<256x32xf32>
    %25 = arith.addf %23, %24 : vector<256x32xf32>
    %c0_20 = arith.constant 0 : index
    %c0_21 = arith.constant 0 : index
    %26 = vector.load %arg3[%c0_20, %c0_21] : memref<8x256xbf16, #tpu.memory_space<vmem>>, vector<8x256xbf16>
    %27 = arith.truncf %25 : vector<256x32xf32> to vector<256x32xbf16>
    %cst_22 = arith.constant dense<0.000000e+00> : vector<8x32xf32>
    %28 = tpu.matmul %26, %27, %cst_22 {dimension_numbers = #tpu.dot_dimension_numbers<[1], [0], [0], [1], [0, 0, 1, 1], [], []>} : vector<8x256xbf16>, vector<256x32xbf16>, vector<8x32xf32> -> vector<8x32xf32>
    %c0_23 = arith.constant 0 : index
    %c0_24 = arith.constant 0 : index
    %29 = vector.load %arg7[%c0_23, %c0_24] : memref<33x4xf32, #tpu.memory_space<vmem>>, vector<32x4xf32>
    %c32_25 = arith.constant 32 : index
    %c0_26 = arith.constant 0 : index
    %30 = vector.load %arg7[%c32_25, %c0_26] : memref<33x4xf32, #tpu.memory_space<vmem>>, vector<1x4xf32>
    %cst_27 = arith.constant dense<0.000000e+00> : vector<8x4xf32>
    %31 = tpu.matmul %28, %29, %cst_27 {dimension_numbers = #tpu.dot_dimension_numbers<[1], [0], [0], [1], [0, 0, 1, 1], [], []>} : vector<8x32xf32>, vector<32x4xf32>, vector<8x4xf32> -> vector<8x4xf32>
    %32 = vector.broadcast %30 : vector<1x4xf32> to vector<8x4xf32>
    %33 = arith.addf %31, %32 : vector<8x4xf32>
    %c0_28 = arith.constant 0 : index
    %c0_29 = arith.constant 0 : index
    %34 = vector.load %arg8[%c0_28, %c0_29] : memref<8x4xf32, #tpu.memory_space<vmem>>, vector<8x4xf32>
    tpu.vector_store %arg8[%c0_28, %c0_29], %33 {strides = array<i32>} : memref<8x4xf32, #tpu.memory_space<vmem>>, vector<8x4xf32>,
    return
  }
  func.func @transform_0(%arg0: i32) -> (i32, i32) {
    %c0_i32 = arith.constant 0 : i32
    %c0_i32_0 = arith.constant 0 : i32
    %c0_i32_1 = arith.constant 0 : i32
    return %c0_i32, %c0_i32_0 : i32, i32
  }
  func.func @transform_1(%arg0: i32) -> (i32, i32) {
    %c0_i32 = arith.constant 0 : i32
    %c0_i32_0 = arith.constant 0 : i32
    %c0_i32_1 = arith.constant 0 : i32
    return %c0_i32, %c0_i32_0 : i32, i32
  }
  func.func @transform_2(%arg0: i32) -> (i32, i32) {
    %c0_i32 = arith.constant 0 : i32
    %c0_i32_0 = arith.constant 0 : i32
    %c0_i32_1 = arith.constant 0 : i32
    return %c0_i32, %c0_i32_0 : i32, i32
  }
  func.func @transform_3(%arg0: i32) -> (i32, i32) {
    %c0_i32 = arith.constant 0 : i32
    %c0_i32_0 = arith.constant 0 : i32
    %c0_i32_1 = arith.constant 0 : i32
    return %c0_i32, %c0_i32_0 : i32, i32
  }
  func.func @transform_4(%arg0: i32) -> (i32, i32) {
    %c0_i32 = arith.constant 0 : i32
    %c0_i32_0 = arith.constant 0 : i32
    %c0_i32_1 = arith.constant 0 : i32
    return %c0_i32, %c0_i32_0 : i32, i32
  }
  func.func @transform_5(%arg0: i32) -> (i32, i32) {
    %c0_i32 = arith.constant 0 : i32
    %c0_i32_0 = arith.constant 0 : i32
    %c0_i32_1 = arith.constant 0 : i32
    return %c0_i32, %c0_i32_0 : i32, i32
  }
  func.func @transform_6(%arg0: i32) -> (i32, i32) {
    %c0_i32 = arith.constant 0 : i32
    %c0_i32_0 = arith.constant 0 : i32
    %c0_i32_1 = arith.constant 0 : i32
    return %c0_i32, %c0_i32_0 : i32, i32
  }
  func.func @transform_7(%arg0: i32) -> (i32, i32) {
    %c0_i32 = arith.constant 0 : i32
    %c0_i32_0 = arith.constant 0 : i32
    %c0_i32_1 = arith.constant 0 : i32
    return %c0_i32, %c0_i32_0 : i32, i32
  }
}

</mosaic_0001>

<llo_original>
// kernel: tpu_custom_call.1
$region0: #{tpu_custom_call.1}
  #allocation0 [shape = 'u32[]', space=smem, size = 0x4, offset = 0x4, fixed_abs, tag = 'smem constant byte address 0x4 - core index']
  #allocation1 [shape = 'u32[144,128]{1,0:T(1,128)}', space=vmem, size = 0x12000, scoped, tag = 'internal scratch']
  %s0 = inlined_call_operand.vmem [shape: bf16[256,256], index: 0, kind: input, shape index: {}]
  %s1 = inlined_call_operand.vmem [shape: bf16[256,4], index: 1, kind: input, shape index: {}]
  %s2 = inlined_call_operand.vmem [shape: bf16[8,256], index: 2, kind: input, shape index: {}]
  %s3 = inlined_call_operand.vmem [shape: f32[5,32], index: 3, kind: input, shape index: {}]
  %s4 = inlined_call_operand.vmem [shape: f32[33,32], index: 4, kind: input, shape index: {}]
  %s5 = inlined_call_operand.vmem [shape: f32[33,32], index: 5, kind: input, shape index: {}]
  %s6 = inlined_call_operand.vmem [shape: f32[33,4], index: 6, kind: input, shape index: {}]
  %s7 = inlined_call_operand.vmem [shape: f32[8,4], index: 7, kind: output, shape index: {}]
  %s8 = sld [smem:[#allocation0]]
  $region38: #{tpu_custom_call.1} parent=0
    _
  %s10 = ssub.s32 1, %s8
  %s11 = scalar_select 0, %s10, %s8
  // Predicated region
  $region2: #{tpu_custom_call.1} parent=0 // pred_check
    _
  $region3: #{tpu_custom_call.1} parent=0 // pred_check_branch
    %13 = sbr.rel (0) target = $region5
  $region4: #{tpu_custom_call.1} parent=0 // pred_region
    _
  $region5: #{tpu_custom_call.1} parent=0 // pred_fallthru
    _
  // Predicated region
  $region6: #{tpu_custom_call.1} parent=0 // pred_check
    _
  $region7: #{tpu_custom_call.1} parent=0 // pred_check_branch
    %15 = sbr.rel (0) target = $region9
  $region8: #{tpu_custom_call.1} parent=0 // pred_region
    _
  $region9: #{tpu_custom_call.1} parent=0 // pred_fallthru
    _
  // Predicated region
  $region10: #{tpu_custom_call.1} parent=0 // pred_check
    _
  $region11: #{tpu_custom_call.1} parent=0 // pred_check_branch
    %17 = sbr.rel (0) target = $region13
  $region12: #{tpu_custom_call.1} parent=0 // pred_region
    _
  $region13: #{tpu_custom_call.1} parent=0 // pred_fallthru
    _
  // Predicated region
  $region14: #{tpu_custom_call.1} parent=0 // pred_check
    _
  $region15: #{tpu_custom_call.1} parent=0 // pred_check_branch
    %19 = sbr.rel (0) target = $region17
  $region16: #{tpu_custom_call.1} parent=0 // pred_region
    _
  $region17: #{tpu_custom_call.1} parent=0 // pred_fallthru
    _
  // Predicated region
  $region18: #{tpu_custom_call.1} parent=0 // pred_check
    _
  $region19: #{tpu_custom_call.1} parent=0 // pred_check_branch
    %21 = sbr.rel (0) target = $region21
  $region20: #{tpu_custom_call.1} parent=0 // pred_region
    _
  $region21: #{tpu_custom_call.1} parent=0 // pred_fallthru
    _
  // Predicated region
  $region22: #{tpu_custom_call.1} parent=0 // pred_check
    _
  $region23: #{tpu_custom_call.1} parent=0 // pred_check_branch
    %23 = sbr.rel (0) target = $region25
  $region24: #{tpu_custom_call.1} parent=0 // pred_region
    _
  $region25: #{tpu_custom_call.1} parent=0 // pred_fallthru
    _
  // Predicated region
  $region26: #{tpu_custom_call.1} parent=0 // pred_check
    _
  $region27: #{tpu_custom_call.1} parent=0 // pred_check_branch
    %25 = sbr.rel (0) target = $region29
  $region28: #{tpu_custom_call.1} parent=0 // pred_region
    _
  $region29: #{tpu_custom_call.1} parent=0 // pred_fallthru
    _
  %v27 = vld [vmem:[%s0] sm:$0xff]
  %v28 = vld [vmem:[%s0 + $0x8] sm:$0xff]
  %v29 = vld [vmem:[%s0 + $0x10] sm:$0xff]
  %v30 = vld [vmem:[%s0 + $0x18] sm:$0xff]
  %v31 = vld [vmem:[%s0 + $0x20] sm:$0xff]
  %v32 = vld [vmem:[%s0 + $0x28] sm:$0xff]
  %v33 = vld [vmem:[%s0 + $0x30] sm:$0xff]
  %v34 = vld [vmem:[%s0 + $0x38] sm:$0xff]
  %v35 = vld [vmem:[%s0 + $0x40] sm:$0xff]
  %v36 = vld [vmem:[%s0 + $0x48] sm:$0xff]
  %v37 = vld [vmem:[%s0 + $0x50] sm:$0xff]
  %v38 = vld [vmem:[%s0 + $0x58] sm:$0xff]
  %v39 = vld [vmem:[%s0 + $0x60] sm:$0xff]
  %v40 = vld [vmem:[%s0 + $0x68] sm:$0xff]
  %v41 = vld [vmem:[%s0 + $0x70] sm:$0xff]
  %v42 = vld [vmem:[%s0 + $0x78] sm:$0xff]
  %v43 = vld [vmem:[%s0 + $0x80] sm:$0xff]
  %v44 = vld [vmem:[%s0 + $0x88] sm:$0xff]
  %v45 = vld [vmem:[%s0 + $0x90] sm:$0xff]
  %v46 = vld [vmem:[%s0 + $0x98] sm:$0xff]
  %v47 = vld [vmem:[%s0 + $0xa0] sm:$0xff]
  %v48 = vld [vmem:[%s0 + $0xa8] sm:$0xff]
  %v49 = vld [vmem:[%s0 + $0xb0] sm:$0xff]
  %v50 = vld [vmem:[%s0 + $0xb8] sm:$0xff]
  %v51 = vld [vmem:[%s0 + $0xc0] sm:$0xff]
  %v52 = vld [vmem:[%s0 + $0xc8] sm:$0xff]
  %v53 = vld [vmem:[%s0 + $0xd0] sm:$0xff]
  %v54 = vld [vmem:[%s0 + $0xd8] sm:$0xff]
  %v55 = vld [vmem:[%s0 + $0xe0] sm:$0xff]
  %v56 = vld [vmem:[%s0 + $0xe8] sm:$0xff]
  %v57 = vld [vmem:[%s0 + $0xf0] sm:$0xff]
  %v58 = vld [vmem:[%s0 + $0xf8] sm:$0xff]
  %v59 = vld [vmem:[%s1] sm:$0xf]
  %v60 = vld [vmem:[%s1 + $0x4] sm:$0xf]
  %v61 = vld [vmem:[%s1 + $0x8] sm:$0xf]
  %v62 = vld [vmem:[%s1 + $0xc] sm:$0xf]
  %v63 = vld [vmem:[%s1 + $0x10] sm:$0xf]
  %v64 = vld [vmem:[%s1 + $0x14] sm:$0xf]
  %v65 = vld [vmem:[%s1 + $0x18] sm:$0xf]
  %v66 = vld [vmem:[%s1 + $0x1c] sm:$0xf]
  %v67 = vld [vmem:[%s1 + $0x20] sm:$0xf]
  %v68 = vld [vmem:[%s1 + $0x24] sm:$0xf]
  %v69 = vld [vmem:[%s1 + $0x28] sm:$0xf]
  %v70 = vld [vmem:[%s1 + $0x2c] sm:$0xf]
  %v71 = vld [vmem:[%s1 + $0x30] sm:$0xf]
  %v72 = vld [vmem:[%s1 + $0x34] sm:$0xf]
  %v73 = vld [vmem:[%s1 + $0x38] sm:$0xf]
  %v74 = vld [vmem:[%s1 + $0x3c] sm:$0xf]
  %v75 = vld [vmem:[%s1 + $0x40] sm:$0xf]
  %v76 = vld [vmem:[%s1 + $0x44] sm:$0xf]
  %v77 = vld [vmem:[%s1 + $0x48] sm:$0xf]
  %v78 = vld [vmem:[%s1 + $0x4c] sm:$0xf]
  %v79 = vld [vmem:[%s1 + $0x50] sm:$0xf]
  %v80 = vld [vmem:[%s1 + $0x54] sm:$0xf]
  %v81 = vld [vmem:[%s1 + $0x58] sm:$0xf]
  %v82 = vld [vmem:[%s1 + $0x5c] sm:$0xf]
  %v83 = vld [vmem:[%s1 + $0x60] sm:$0xf]
  %v84 = vld [vmem:[%s1 + $0x64] sm:$0xf]
  %v85 = vld [vmem:[%s1 + $0x68] sm:$0xf]
  %v86 = vld [vmem:[%s1 + $0x6c] sm:$0xf]
  %v87 = vld [vmem:[%s1 + $0x70] sm:$0xf]
  %v88 = vld [vmem:[%s1 + $0x74] sm:$0xf]
  %v89 = vld [vmem:[%s1 + $0x78] sm:$0xf]
  %v90 = vld [vmem:[%s1 + $0x7c] sm:$0xf]
  %v123 = vunpack.c.l.b16 %v27
  %v124 = vunpack.c.h.b16 %v27
  %v125 = vunpack.c.l.b16 %v28
  %v126 = vunpack.c.h.b16 %v28
  %v127 = vunpack.c.l.b16 %v29
  %v128 = vunpack.c.h.b16 %v29
  %v129 = vunpack.c.l.b16 %v30
  %v130 = vunpack.c.h.b16 %v30
  %v131 = vunpack.c.l.b16 %v31
  %v132 = vunpack.c.h.b16 %v31
  %v133 = vunpack.c.l.b16 %v32
  %v134 = vunpack.c.h.b16 %v32
  %v135 = vunpack.c.l.b16 %v33
  %v136 = vunpack.c.h.b16 %v33
  %v137 = vunpack.c.l.b16 %v34
  %v138 = vunpack.c.h.b16 %v34
  %v139 = vunpack.c.l.b16 %v35
  %v140 = vunpack.c.h.b16 %v35
  %v141 = vunpack.c.l.b16 %v36
  %v142 = vunpack.c.h.b16 %v36
  %v143 = vunpack.c.l.b16 %v37
  %v144 = vunpack.c.h.b16 %v37
  %v145 = vunpack.c.l.b16 %v38
  %v146 = vunpack.c.h.b16 %v38
  %v147 = vunpack.c.l.b16 %v39
  %v148 = vunpack.c.h.b16 %v39
  %v149 = vunpack.c.l.b16 %v40
  %v150 = vunpack.c.h.b16 %v40
  %v151 = vunpack.c.l.b16 %v41
  %v152 = vunpack.c.h.b16 %v41
  %v153 = vunpack.c.l.b16 %v42
  %v154 = vunpack.c.h.b16 %v42
  %v155 = vunpack.c.l.b16 %v43
  %v156 = vunpack.c.h.b16 %v43
  %v157 = vunpack.c.l.b16 %v44
  %v158 = vunpack.c.h.b16 %v44
  %v159 = vunpack.c.l.b16 %v45
  %v160 = vunpack.c.h.b16 %v45
  %v161 = vunpack.c.l.b16 %v46
  %v162 = vunpack.c.h.b16 %v46
  %v163 = vunpack.c.l.b16 %v47
  %v164 = vunpack.c.h.b16 %v47
  %v165 = vunpack.c.l.b16 %v48
  %v166 = vunpack.c.h.b16 %v48
  %v167 = vunpack.c.l.b16 %v49
  %v168 = vunpack.c.h.b16 %v49
  %v169 = vunpack.c.l.b16 %v50
  %v170 = vunpack.c.h.b16 %v50
  %v171 = vunpack.c.l.b16 %v51
  %v172 = vunpack.c.h.b16 %v51
  %v173 = vunpack.c.l.b16 %v52
  %v174 = vunpack.c.h.b16 %v52
  %v175 = vunpack.c.l.b16 %v53
  %v176 = vunpack.c.h.b16 %v53
  %v177 = vunpack.c.l.b16 %v54
  %v178 = vunpack.c.h.b16 %v54
  %v179 = vunpack.c.l.b16 %v55
  %v180 = vunpack.c.h.b16 %v55
  %v181 = vunpack.c.l.b16 %v56
  %v182 = vunpack.c.h.b16 %v56
  %v183 = vunpack.c.l.b16 %v57
  %v184 = vunpack.c.h.b16 %v57
  %v185 = vunpack.c.l.b16 %v58
  %v186 = vunpack.c.h.b16 %v58
  %v187 = vpack.c.b16 %v125, %v123
  %v188 = vpack.c.b16 %v126, %v124
  %v189 = vpack.c.b16 %v129, %v127
  %v190 = vpack.c.b16 %v130, %v128
  %v191 = vpack.c.b16 %v133, %v131
  %v192 = vpack.c.b16 %v134, %v132
  %v193 = vpack.c.b16 %v137, %v135
  %v194 = vpack.c.b16 %v138, %v136
  %v195 = vpack.c.b16 %v141, %v139
  %v196 = vpack.c.b16 %v142, %v140
  %v197 = vpack.c.b16 %v145, %v143
  %v198 = vpack.c.b16 %v146, %v144
  %v199 = vpack.c.b16 %v149, %v147
  %v200 = vpack.c.b16 %v150, %v148
  %v201 = vpack.c.b16 %v153, %v151
  %v202 = vpack.c.b16 %v154, %v152
  %v203 = vpack.c.b16 %v157, %v155
  %v204 = vpack.c.b16 %v158, %v156
  %v205 = vpack.c.b16 %v161, %v159
  %v206 = vpack.c.b16 %v162, %v160
  %v207 = vpack.c.b16 %v165, %v163
  %v208 = vpack.c.b16 %v166, %v164
  %v209 = vpack.c.b16 %v169, %v167
  %v210 = vpack.c.b16 %v170, %v168
  %v211 = vpack.c.b16 %v173, %v171
  %v212 = vpack.c.b16 %v174, %v172
  %v213 = vpack.c.b16 %v177, %v175
  %v214 = vpack.c.b16 %v178, %v176
  %v215 = vpack.c.b16 %v181, %v179
  %v216 = vpack.c.b16 %v182, %v180
  %v217 = vpack.c.b16 %v185, %v183
  %v218 = vpack.c.b16 %v186, %v184
  %v283 = vunpack.c.l.b16 %v59
  %v284 = vunpack.c.l.b16 %v60
  %v285 = vunpack.c.l.b16 %v61
  %v286 = vunpack.c.l.b16 %v62
  %v287 = vunpack.c.l.b16 %v63
  %v288 = vunpack.c.l.b16 %v64
  %v289 = vunpack.c.l.b16 %v65
  %v290 = vunpack.c.l.b16 %v66
  %v291 = vunpack.c.l.b16 %v67
  %v292 = vunpack.c.l.b16 %v68
  %v293 = vunpack.c.l.b16 %v69
  %v294 = vunpack.c.l.b16 %v70
  %v295 = vunpack.c.l.b16 %v71
  %v296 = vunpack.c.l.b16 %v72
  %v297 = vunpack.c.l.b16 %v73
  %v298 = vunpack.c.l.b16 %v74
  %v299 = vunpack.c.l.b16 %v75
  %v300 = vunpack.c.l.b16 %v76
  %v301 = vunpack.c.l.b16 %v77
  %v302 = vunpack.c.l.b16 %v78
  %v303 = vunpack.c.l.b16 %v79
  %v304 = vunpack.c.l.b16 %v80
  %v305 = vunpack.c.l.b16 %v81
  %v306 = vunpack.c.l.b16 %v82
  %v307 = vunpack.c.l.b16 %v83
  %v308 = vunpack.c.l.b16 %v84
  %v309 = vunpack.c.l.b16 %v85
  %v310 = vunpack.c.l.b16 %v86
  %v311 = vunpack.c.l.b16 %v87
  %v312 = vunpack.c.l.b16 %v88
  %v313 = vunpack.c.l.b16 %v89
  %v314 = vunpack.c.l.b16 %v90
  %v315 = vpack.c.b16 %v284, %v283
  %v316 = vpack.c.b16 %v286, %v285
  %v317 = vpack.c.b16 %v288, %v287
  %v318 = vpack.c.b16 %v290, %v289
  %v319 = vpack.c.b16 %v292, %v291
  %v320 = vpack.c.b16 %v294, %v293
  %v321 = vpack.c.b16 %v296, %v295
  %v322 = vpack.c.b16 %v298, %v297
  %v323 = vpack.c.b16 %v300, %v299
  %v324 = vpack.c.b16 %v302, %v301
  %v325 = vpack.c.b16 %v304, %v303
  %v326 = vpack.c.b16 %v306, %v305
  %v327 = vpack.c.b16 %v308, %v307
  %v328 = vpack.c.b16 %v310, %v309
  %v329 = vpack.c.b16 %v312, %v311
  %v330 = vpack.c.b16 %v314, %v313
  %347 = vmatprep.subr.bf16.mxu0 0
  %348 = vmatpush1.bf16.msra.mxu0 %v315
  %349 = vmatprep.subr.bf16.mxu0 0
  %350 = vmatpush1.bf16.msra.mxu0 %v316
  %351 = vmatprep.subr.bf16.mxu0 0
  %352 = vmatpush1.bf16.msra.mxu0 %v317
  %353 = vmatprep.subr.bf16.mxu0 0
  %354 = vmatpush1.bf16.msra.mxu0 %v318
  %355 = vmatprep.subr.bf16.mxu0 0
  %356 = vmatpush1.bf16.msra.mxu0 %v319
  %357 = vmatprep.subr.bf16.mxu0 0
  %358 = vmatpush1.bf16.msra.mxu0 %v320
  %359 = vmatprep.subr.bf16.mxu0 0
  %360 = vmatpush1.bf16.msra.mxu0 %v321
  %361 = vmatprep.subr.bf16.mxu0 0
  %362 = vmatpush1.bf16.msra.mxu0 %v322
  %363 = vmatprep.subr.bf16.mxu0 0
  %364 = vmatpush1.bf16.msra.mxu0 %v323
  %365 = vmatprep.subr.bf16.mxu0 0
  %366 = vmatpush1.bf16.msra.mxu0 %v324
  %367 = vmatprep.subr.bf16.mxu0 0
  %368 = vmatpush1.bf16.msra.mxu0 %v325
  %369 = vmatprep.subr.bf16.mxu0 0
  %370 = vmatpush1.bf16.msra.mxu0 %v326
  %371 = vmatprep.subr.bf16.mxu0 0
  %372 = vmatpush1.bf16.msra.mxu0 %v327
  %373 = vmatprep.subr.bf16.mxu0 0
  %374 = vmatpush1.bf16.msra.mxu0 %v328
  %375 = vmatprep.subr.bf16.mxu0 0
  %376 = vmatpush1.bf16.msra.mxu0 %v329
  %377 = vmatprep.subr.bf16.mxu0 0
  %378 = vmatpush1.bf16.msra.mxu0 %v330
  %379 = vmatprep.mubr.bf16.mxu0 %v188
  %380 = vmatmul.mubr.bf16.gmra.mrb[0].mxu0 %v187
  %v381 = vpop.f32.mrb[0].mxu0
  %v382 = vadd.f32 0.0, %v381
  %v383 = vpop.f32.mrb[0].mxu0
  %v384 = vpop.f32.mrb[0].mxu0
  %v385 = vadd.f32 0.0, %v384
  %v386 = vpop.f32.mrb[0].mxu0
  %387 = vmatprep.mubr.bf16.mxu0 %v190
  %388 = vmatmul.mubr.bf16.gmra.mrb[0].mxu0 %v189
  %v389 = vpop.f32.mrb[0].mxu0
  %v390 = vadd.f32 0.0, %v389
  %v391 = vpop.f32.mrb[0].mxu0
  %v392 = vpop.f32.mrb[0].mxu0
  %v393 = vadd.f32 0.0, %v392
  %v394 = vpop.f32.mrb[0].mxu0
  %395 = vmatprep.mubr.bf16.mxu0 %v192
  %396 = vmatmul.mubr.bf16.gmra.mrb[0].mxu0 %v191
  %v397 = vpop.f32.mrb[0].mxu0
  %v398 = vadd.f32 0.0, %v397
  %v399 = vpop.f32.mrb[0].mxu0
  %v400 = vpop.f32.mrb[0].mxu0
  %v401 = vadd.f32 0.0, %v400
  %v402 = vpop.f32.mrb[0].mxu0
  %403 = vmatprep.mubr.bf16.mxu0 %v194
  %404 = vmatmul.mubr.bf16.gmra.mrb[0].mxu0 %v193
  %v405 = vpop.f32.mrb[0].mxu0
  %v406 = vadd.f32 0.0, %v405
  %v407 = vpop.f32.mrb[0].mxu0
  %v408 = vpop.f32.mrb[0].mxu0
  %v409 = vadd.f32 0.0, %v408
  %v410 = vpop.f32.mrb[0].mxu0
  %411 = vmatprep.mubr.bf16.mxu0 %v196
  %412 = vmatmul.mubr.bf16.gmra.mrb[0].mxu0 %v195
  %v413 = vpop.f32.mrb[0].mxu0
  %v414 = vadd.f32 0.0, %v413
  %v415 = vpop.f32.mrb[0].mxu0
  %v416 = vpop.f32.mrb[0].mxu0
  %v417 = vadd.f32 0.0, %v416
  %v418 = vpop.f32.mrb[0].mxu0
  %419 = vmatprep.mubr.bf16.mxu0 %v198
  %420 = vmatmul.mubr.bf16.gmra.mrb[0].mxu0 %v197
  %v421 = vpop.f32.mrb[0].mxu0
  %v422 = vadd.f32 0.0, %v421
  %v423 = vpop.f32.mrb[0].mxu0
  %v424 = vpop.f32.mrb[0].mxu0
  %v425 = vadd.f32 0.0, %v424
  %v426 = vpop.f32.mrb[0].mxu0
  %427 = vmatprep.mubr.bf16.mxu0 %v200
  %428 = vmatmul.mubr.bf16.gmra.mrb[0].mxu0 %v199
  %v429 = vpop.f32.mrb[0].mxu0
  %v430 = vadd.f32 0.0, %v429
  %v431 = vpop.f32.mrb[0].mxu0
  %v432 = vpop.f32.mrb[0].mxu0
  %v433 = vadd.f32 0.0, %v432
  %v434 = vpop.f32.mrb[0].mxu0
  %435 = vmatprep.mubr.bf16.mxu0 %v202
  %436 = vmatmul.mubr.bf16.gmra.mrb[0].mxu0 %v201
  %v437 = vpop.f32.mrb[0].mxu0
  %v438 = vadd.f32 0.0, %v437
  %v439 = vpop.f32.mrb[0].mxu0
  %v440 = vpop.f32.mrb[0].mxu0
  %v441 = vadd.f32 0.0, %v440
  %v442 = vpop.f32.mrb[0].mxu0
  %443 = vmatprep.mubr.bf16.mxu0 %v204
  %444 = vmatmul.mubr.bf16.gmra.mrb[0].mxu0 %v203
  %v445 = vpop.f32.mrb[0].mxu0
  %v446 = vadd.f32 0.0, %v445
  %v447 = vpop.f32.mrb[0].mxu0
  %v448 = vpop.f32.mrb[0].mxu0
  %v449 = vadd.f32 0.0, %v448
  %v450 = vpop.f32.mrb[0].mxu0
  %451 = vmatprep.mubr.bf16.mxu0 %v206
  %452 = vmatmul.mubr.bf16.gmra.mrb[0].mxu0 %v205
  %v453 = vpop.f32.mrb[0].mxu0
  %v454 = vadd.f32 0.0, %v453
  %v455 = vpop.f32.mrb[0].mxu0
  %v456 = vpop.f32.mrb[0].mxu0
  %v457 = vadd.f32 0.0, %v456
  %v458 = vpop.f32.mrb[0].mxu0
  %459 = vmatprep.mubr.bf16.mxu0 %v208
  %460 = vmatmul.mubr.bf16.gmra.mrb[0].mxu0 %v207
  %v461 = vpop.f32.mrb[0].mxu0
  %v462 = vadd.f32 0.0, %v461
  %v463 = vpop.f32.mrb[0].mxu0
  %v464 = vpop.f32.mrb[0].mxu0
  %v465 = vadd.f32 0.0, %v464
  %v466 = vpop.f32.mrb[0].mxu0
  %467 = vmatprep.mubr.bf16.mxu0 %v210
  %468 = vmatmul.mubr.bf16.gmra.mrb[0].mxu0 %v209
  %v469 = vpop.f32.mrb[0].mxu0
  %v470 = vadd.f32 0.0, %v469
  %v471 = vpop.f32.mrb[0].mxu0
  %v472 = vpop.f32.mrb[0].mxu0
  %v473 = vadd.f32 0.0, %v472
  %v474 = vpop.f32.mrb[0].mxu0
  %475 = vmatprep.mubr.bf16.mxu0 %v212
  %476 = vmatmul.mubr.bf16.gmra.mrb[0].mxu0 %v211
  %v477 = vpop.f32.mrb[0].mxu0
  %v478 = vadd.f32 0.0, %v477
  %v479 = vpop.f32.mrb[0].mxu0
  %v480 = vpop.f32.mrb[0].mxu0
  %v481 = vadd.f32 0.0, %v480
  %v482 = vpop.f32.mrb[0].mxu0
  %483 = vmatprep.mubr.bf16.mxu0 %v214
  %484 = vmatmul.mubr.bf16.gmra.mrb[0].mxu0 %v213
  %v485 = vpop.f32.mrb[0].mxu0
  %v486 = vadd.f32 0.0, %v485
  %v487 = vpop.f32.mrb[0].mxu0
  %v488 = vpop.f32.mrb[0].mxu0
  %v489 = vadd.f32 0.0, %v488
  %v490 = vpop.f32.mrb[0].mxu0
  %491 = vmatprep.mubr.bf16.mxu0 %v216
  %492 = vmatmul.mubr.bf16.gmra.mrb[0].mxu0 %v215
  %v493 = vpop.f32.mrb[0].mxu0
  %v494 = vadd.f32 0.0, %v493
  %v495 = vpop.f32.mrb[0].mxu0
  %v496 = vpop.f32.mrb[0].mxu0
  %v497 = vadd.f32 0.0, %v496
  %v498 = vpop.f32.mrb[0].mxu0
  %499 = vmatprep.mubr.bf16.mxu0 %v218
  %500 = vmatmul.mubr.bf16.gmra.mrb[0].mxu0 %v217
  %v501 = vpop.f32.mrb[0].mxu0
  %v502 = vadd.f32 0.0, %v501
  %v503 = vpop.f32.mrb[0].mxu0
  %v504 = vpop.f32.mrb[0].mxu0
  %v505 = vadd.f32 0.0, %v504
  %v506 = vpop.f32.mrb[0].mxu0
  %507 = vdwg.mxu0
  %v508 = vld [vmem:[%s3] sm:$0xf]
  %v509 = vld [vmem:[%s3 + $0x4] sm:$0x1]
  %v510 = vlaneseq
  %v511 = vshrl.u32 %v510, 7
  %v512 = vsub.s32 0, %v511
  %v513 = vrot.slane %v509, %v512
  %vm514 = vcmask 31744
  %v516 = vsel %vm514, %v382, 0
  %v519 = vsel %vm514, %v385, 0
  %v522 = vsel %vm514, %v390, 0
  %v525 = vsel %vm514, %v393, 0
  %v528 = vsel %vm514, %v398, 0
  %v531 = vsel %vm514, %v401, 0
  %v534 = vsel %vm514, %v406, 0
  %v537 = vsel %vm514, %v409, 0
  %v540 = vsel %vm514, %v414, 0
  %v543 = vsel %vm514, %v417, 0
  %v546 = vsel %vm514, %v422, 0
  %v549 = vsel %vm514, %v425, 0
  %v552 = vsel %vm514, %v430, 0
  %v555 = vsel %vm514, %v433, 0
  %v558 = vsel %vm514, %v438, 0
  %v561 = vsel %vm514, %v441, 0
  %v564 = vsel %vm514, %v446, 0
  %v567 = vsel %vm514, %v449, 0
  %v570 = vsel %vm514, %v454, 0
  %v573 = vsel %vm514, %v457, 0
  %v576 = vsel %vm514, %v462, 0
  %v579 = vsel %vm514, %v465, 0
  %v582 = vsel %vm514, %v470, 0
  %v585 = vsel %vm514, %v473, 0
  %v588 = vsel %vm514, %v478, 0
  %v591 = vsel %vm514, %v481, 0
  %v594 = vsel %vm514, %v486, 0
  %v597 = vsel %vm514, %v489, 0
  %v600 = vsel %vm514, %v494, 0
  %v603 = vsel %vm514, %v497, 0
  %v606 = vsel %vm514, %v502, 0
  %v609 = vsel %vm514, %v505, 0
  %vm611 = vcmask 1043456
  %v613 = vsel %vm611, %v508, 0
  %615 = vmatprep.subr.mxu0 0.0
  %616 = vmatpush1.msra.mxu0 %v613
  %617 = vmatprep.subr.mxu0 0.0
  %618 = vmatpush1.msra.mxu0 0.0
  %619 = vmatprep.subr.mxu0 0.0
  %620 = vmatpush1.msra.mxu0 0.0
  %621 = vmatprep.subr.mxu0 0.0
  %622 = vmatpush1.msra.mxu0 0.0
  %623 = vmatprep.subr.mxu0 0.0
  %624 = vmatpush1.msra.mxu0 0.0
  %625 = vmatprep.subr.mxu0 0.0
  %626 = vmatpush1.msra.mxu0 0.0
  %627 = vmatprep.subr.mxu0 0.0
  %628 = vmatpush1.msra.mxu0 0.0
  %629 = vmatprep.subr.mxu0 0.0
  %630 = vmatpush1.msra.mxu0 0.0
  %631 = vmatprep.subr.mxu0 0.0
  %632 = vmatpush1.msra.mxu0 0.0
  %633 = vmatprep.subr.mxu0 0.0
  %634 = vmatpush1.msra.mxu0 0.0
  %635 = vmatprep.subr.mxu0 0.0
  %636 = vmatpush1.msra.mxu0 0.0
  %637 = vmatprep.subr.mxu0 0.0
  %638 = vmatpush1.msra.mxu0 0.0
  %639 = vmatprep.subr.mxu0 0.0
  %640 = vmatpush1.msra.mxu0 0.0
  %641 = vmatprep.subr.mxu0 0.0
  %642 = vmatpush1.msra.mxu0 0.0
  %643 = vmatprep.subr.mxu0 0.0
  %644 = vmatpush1.msra.mxu0 0.0
  %645 = vmatprep.subr.mxu0 0.0
  %646 = vmatpush1.msra.mxu0 0.0
  %647 = vmatprep.subr.mxu0 0.0
  %648 = vmatpush1.msra.mxu0 0.0
  %649 = vmatprep.subr.mxu0 0.0
  %650 = vmatpush1.msra.mxu0 0.0
  %651 = vmatprep.subr.mxu0 0.0
  %652 = vmatpush1.msra.mxu0 0.0
  %653 = vmatprep.subr.mxu0 0.0
  %654 = vmatpush1.msra.mxu0 0.0
  %655 = vmatprep.subr.mxu0 0.0
  %656 = vmatpush1.msra.mxu0 0.0
  %657 = vmatprep.subr.mxu0 0.0
  %658 = vmatpush1.msra.mxu0 0.0
  %659 = vmatprep.subr.mxu0 0.0
  %660 = vmatpush1.msra.mxu0 0.0
  %661 = vmatprep.subr.mxu0 0.0
  %662 = vmatpush1.msra.mxu0 0.0
  %663 = vmatprep.subr.mxu0 0.0
  %664 = vmatpush1.msra.mxu0 0.0
  %665 = vmatprep.subr.mxu0 0.0
  %666 = vmatpush1.msra.mxu0 0.0
  %667 = vmatprep.subr.mxu0 0.0
  %668 = vmatpush1.msra.mxu0 0.0
  %669 = vmatprep.subr.mxu0 0.0
  %670 = vmatpush1.msra.mxu0 0.0
  %671 = vmatprep.subr.mxu0 0.0
  %672 = vmatpush1.msra.mxu0 0.0
  %673 = vmatprep.subr.mxu0 0.0
  %674 = vmatpush1.msra.mxu0 0.0
  %675 = vmatprep.subr.mxu0 0.0
  %676 = vmatpush1.msra.mxu0 0.0
  %677 = vmatprep.subr.mxu0 0.0
  %678 = vmatpush1.msra.mxu0 0.0
  %679 = vmatprep.mubr.f32.mxu0 0.0
  %680 = vmatmul.mubr.f32.gmra.mrb[0].mxu0 %v516
  %v681 = vpop.f32.mrb[0].mxu0
  %v682 = vadd.f32 %v513, %v681
  %v683 = vpop.f32.mrb[0].mxu0
  %684 = vmatprep.mubr.f32.mxu0 0.0
  %685 = vmatmul.mubr.f32.gmra.mrb[0].mxu0 %v519
  %v686 = vpop.f32.mrb[0].mxu0
  %v687 = vadd.f32 %v513, %v686
  %v688 = vpop.f32.mrb[0].mxu0
  %689 = vmatprep.mubr.f32.mxu0 0.0
  %690 = vmatmul.mubr.f32.gmra.mrb[0].mxu0 %v522
  %v691 = vpop.f32.mrb[0].mxu0
  %v692 = vadd.f32 %v513, %v691
  %v693 = vpop.f32.mrb[0].mxu0
  %694 = vmatprep.mubr.f32.mxu0 0.0
  %695 = vmatmul.mubr.f32.gmra.mrb[0].mxu0 %v525
  %v696 = vpop.f32.mrb[0].mxu0
  %v697 = vadd.f32 %v513, %v696
  %v698 = vpop.f32.mrb[0].mxu0
  %699 = vmatprep.mubr.f32.mxu0 0.0
  %700 = vmatmul.mubr.f32.gmra.mrb[0].mxu0 %v528
  %v701 = vpop.f32.mrb[0].mxu0
  %v702 = vadd.f32 %v513, %v701
  %v703 = vpop.f32.mrb[0].mxu0
  %704 = vmatprep.mubr.f32.mxu0 0.0
  %705 = vmatmul.mubr.f32.gmra.mrb[0].mxu0 %v531
  %v706 = vpop.f32.mrb[0].mxu0
  %v707 = vadd.f32 %v513, %v706
  %v708 = vpop.f32.mrb[0].mxu0
  %709 = vmatprep.mubr.f32.mxu0 0.0
  %710 = vmatmul.mubr.f32.gmra.mrb[0].mxu0 %v534
  %v711 = vpop.f32.mrb[0].mxu0
  %v712 = vadd.f32 %v513, %v711
  %v713 = vpop.f32.mrb[0].mxu0
  %714 = vmatprep.mubr.f32.mxu0 0.0
  %715 = vmatmul.mubr.f32.gmra.mrb[0].mxu0 %v537
  %v716 = vpop.f32.mrb[0].mxu0
  %v717 = vadd.f32 %v513, %v716
  %v718 = vpop.f32.mrb[0].mxu0
  %719 = vmatprep.mubr.f32.mxu0 0.0
  %720 = vmatmul.mubr.f32.gmra.mrb[0].mxu0 %v540
  %v721 = vpop.f32.mrb[0].mxu0
  %v722 = vadd.f32 %v513, %v721
  %v723 = vpop.f32.mrb[0].mxu0
  %724 = vmatprep.mubr.f32.mxu0 0.0
  %725 = vmatmul.mubr.f32.gmra.mrb[0].mxu0 %v543
  %v726 = vpop.f32.mrb[0].mxu0
  %v727 = vadd.f32 %v513, %v726
  %v728 = vpop.f32.mrb[0].mxu0
  %729 = vmatprep.mubr.f32.mxu0 0.0
  %730 = vmatmul.mubr.f32.gmra.mrb[0].mxu0 %v546
  %v731 = vpop.f32.mrb[0].mxu0
  %v732 = vadd.f32 %v513, %v731
  %v733 = vpop.f32.mrb[0].mxu0
  %734 = vmatprep.mubr.f32.mxu0 0.0
  %735 = vmatmul.mubr.f32.gmra.mrb[0].mxu0 %v549
  %v736 = vpop.f32.mrb[0].mxu0
  %v737 = vadd.f32 %v513, %v736
  %v738 = vpop.f32.mrb[0].mxu0
  %739 = vmatprep.mubr.f32.mxu0 0.0
  %740 = vmatmul.mubr.f32.gmra.mrb[0].mxu0 %v552
  %v741 = vpop.f32.mrb[0].mxu0
  %v742 = vadd.f32 %v513, %v741
  %v743 = vpop.f32.mrb[0].mxu0
  %744 = vmatprep.mubr.f32.mxu0 0.0
  %745 = vmatmul.mubr.f32.gmra.mrb[0].mxu0 %v555
  %v746 = vpop.f32.mrb[0].mxu0
  %v747 = vadd.f32 %v513, %v746
  %v748 = vpop.f32.mrb[0].mxu0
  %749 = vmatprep.mubr.f32.mxu0 0.0
  %750 = vmatmul.mubr.f32.gmra.mrb[0].mxu0 %v558
  %v751 = vpop.f32.mrb[0].mxu0
  %v752 = vadd.f32 %v513, %v751
  %v753 = vpop.f32.mrb[0].mxu0
  %754 = vmatprep.mubr.f32.mxu0 0.0
  %755 = vmatmul.mubr.f32.gmra.mrb[0].mxu0 %v561
  %v756 = vpop.f32.mrb[0].mxu0
  %v757 = vadd.f32 %v513, %v756
  %v758 = vpop.f32.mrb[0].mxu0
  %759 = vmatprep.mubr.f32.mxu0 0.0
  %760 = vmatmul.mubr.f32.gmra.mrb[0].mxu0 %v564
  %v761 = vpop.f32.mrb[0].mxu0
  %v762 = vadd.f32 %v513, %v761
  %v763 = vpop.f32.mrb[0].mxu0
  %764 = vmatprep.mubr.f32.mxu0 0.0
  %765 = vmatmul.mubr.f32.gmra.mrb[0].mxu0 %v567
  %v766 = vpop.f32.mrb[0].mxu0
  %v767 = vadd.f32 %v513, %v766
  %v768 = vpop.f32.mrb[0].mxu0
  %769 = vmatprep.mubr.f32.mxu0 0.0
  %770 = vmatmul.mubr.f32.gmra.mrb[0].mxu0 %v570
  %v771 = vpop.f32.mrb[0].mxu0
  %v772 = vadd.f32 %v513, %v771
  %v773 = vpop.f32.mrb[0].mxu0
  %774 = vmatprep.mubr.f32.mxu0 0.0
  %775 = vmatmul.mubr.f32.gmra.mrb[0].mxu0 %v573
  %v776 = vpop.f32.mrb[0].mxu0
  %v777 = vadd.f32 %v513, %v776
  %v778 = vpop.f32.mrb[0].mxu0
  %779 = vmatprep.mubr.f32.mxu0 0.0
  %780 = vmatmul.mubr.f32.gmra.mrb[0].mxu0 %v576
  %v781 = vpop.f32.mrb[0].mxu0
  %v782 = vadd.f32 %v513, %v781
  %v783 = vpop.f32.mrb[0].mxu0
  %784 = vmatprep.mubr.f32.mxu0 0.0
  %785 = vmatmul.mubr.f32.gmra.mrb[0].mxu0 %v579
  %v786 = vpop.f32.mrb[0].mxu0
  %v787 = vadd.f32 %v513, %v786
  %v788 = vpop.f32.mrb[0].mxu0
  %789 = vmatprep.mubr.f32.mxu0 0.0
  %790 = vmatmul.mubr.f32.gmra.mrb[0].mxu0 %v582
  %v791 = vpop.f32.mrb[0].mxu0
  %v792 = vadd.f32 %v513, %v791
  %v793 = vpop.f32.mrb[0].mxu0
  %794 = vmatprep.mubr.f32.mxu0 0.0
  %795 = vmatmul.mubr.f32.gmra.mrb[0].mxu0 %v585
  %v796 = vpop.f32.mrb[0].mxu0
  %v797 = vadd.f32 %v513, %v796
  %v798 = vpop.f32.mrb[0].mxu0
  %799 = vmatprep.mubr.f32.mxu0 0.0
  %800 = vmatmul.mubr.f32.gmra.mrb[0].mxu0 %v588
  %v801 = vpop.f32.mrb[0].mxu0
  %v802 = vadd.f32 %v513, %v801
  %v803 = vpop.f32.mrb[0].mxu0
  %804 = vmatprep.mubr.f32.mxu0 0.0
  %805 = vmatmul.mubr.f32.gmra.mrb[0].mxu0 %v591
  %v806 = vpop.f32.mrb[0].mxu0
  %v807 = vadd.f32 %v513, %v806
  %v808 = vpop.f32.mrb[0].mxu0
  %809 = vmatprep.mubr.f32.mxu0 0.0
  %810 = vmatmul.mubr.f32.gmra.mrb[0].mxu0 %v594
  %v811 = vpop.f32.mrb[0].mxu0
  %v812 = vadd.f32 %v513, %v811
  %v813 = vpop.f32.mrb[0].mxu0
  %814 = vmatprep.mubr.f32.mxu0 0.0
  %815 = vmatmul.mubr.f32.gmra.mrb[0].mxu0 %v597
  %v816 = vpop.f32.mrb[0].mxu0
  %v817 = vadd.f32 %v513, %v816
  %v818 = vpop.f32.mrb[0].mxu0
  %819 = vmatprep.mubr.f32.mxu0 0.0
  %820 = vmatmul.mubr.f32.gmra.mrb[0].mxu0 %v600
  %v821 = vpop.f32.mrb[0].mxu0
  %v822 = vadd.f32 %v513, %v821
  %v823 = vpop.f32.mrb[0].mxu0
  %824 = vmatprep.mubr.f32.mxu0 0.0
  %825 = vmatmul.mubr.f32.gmra.mrb[0].mxu0 %v603
  %v826 = vpop.f32.mrb[0].mxu0
  %v827 = vadd.f32 %v513, %v826
  %v828 = vpop.f32.mrb[0].mxu0
  %829 = vmatprep.mubr.f32.mxu0 0.0
  %830 = vmatmul.mubr.f32.gmra.mrb[0].mxu0 %v606
  %v831 = vpop.f32.mrb[0].mxu0
  %v832 = vadd.f32 %v513, %v831
  %v833 = vpop.f32.mrb[0].mxu0
  %834 = vmatprep.mubr.f32.mxu0 0.0
  %835 = vmatmul.mubr.f32.gmra.mrb[0].mxu0 %v609
  %v836 = vpop.f32.mrb[0].mxu0
  %v837 = vadd.f32 %v513, %v836
  %v838 = vpop.f32.mrb[0].mxu0
  %839 = vdwg.mxu0
  %v840 = vmax.f32 %v682, 0.0
  %v841 = vmax.f32 %v687, 0.0
  %v842 = vmax.f32 %v692, 0.0
  %v843 = vmax.f32 %v697, 0.0
  %v844 = vmax.f32 %v702, 0.0
  %v845 = vmax.f32 %v707, 0.0
  %v846 = vmax.f32 %v712, 0.0
  %v847 = vmax.f32 %v717, 0.0
  %v848 = vmax.f32 %v722, 0.0
  %v849 = vmax.f32 %v727, 0.0
  %v850 = vmax.f32 %v732, 0.0
  %v851 = vmax.f32 %v737, 0.0
  %v852 = vmax.f32 %v742, 0.0
  %v853 = vmax.f32 %v747, 0.0
  %v854 = vmax.f32 %v752, 0.0
  %v855 = vmax.f32 %v757, 0.0
  %v856 = vmax.f32 %v762, 0.0
  %v857 = vmax.f32 %v767, 0.0
  %v858 = vmax.f32 %v772, 0.0
  %v859 = vmax.f32 %v777, 0.0
  %v860 = vmax.f32 %v782, 0.0
  %v861 = vmax.f32 %v787, 0.0
  %v862 = vmax.f32 %v792, 0.0
  %v863 = vmax.f32 %v797, 0.0
  %v864 = vmax.f32 %v802, 0.0
  %v865 = vmax.f32 %v807, 0.0
  %v866 = vmax.f32 %v812, 0.0
  %v867 = vmax.f32 %v817, 0.0
  %v868 = vmax.f32 %v822, 0.0
  %v869 = vmax.f32 %v827, 0.0
  %v870 = vmax.f32 %v832, 0.0
  %v871 = vmax.f32 %v837, 0.0
  %v872 = vpack.c.bf16 %v841, %v840
  %v873 = vpack.c.bf16 %v843, %v842
  %v874 = vpack.c.bf16 %v845, %v844
  %v875 = vpack.c.bf16 %v847, %v846
  %v876 = vpack.c.bf16 %v849, %v848
  %v877 = vpack.c.bf16 %v851, %v850
  %v878 = vpack.c.bf16 %v853, %v852
  %v879 = vpack.c.bf16 %v855, %v854
  %v880 = vpack.c.bf16 %v857, %v856
  %v881 = vpack.c.bf16 %v859, %v858
  %v882 = vpack.c.bf16 %v861, %v860
  %v883 = vpack.c.bf16 %v863, %v862
  %v884 = vpack.c.bf16 %v865, %v864
  %v885 = vpack.c.bf16 %v867, %v866
  %v886 = vpack.c.bf16 %v869, %v868
  %v887 = vpack.c.bf16 %v871, %v870
  %888 = vmatprep.subr.bf16.mxu0 0
  %889 = vmatpush1.bf16.msra.mxu0 %v872
  %890 = vmatprep.subr.bf16.mxu0 0
  %891 = vmatpush1.bf16.msra.mxu0 %v873
  %892 = vmatprep.subr.bf16.mxu0 0
  %893 = vmatpush1.bf16.msra.mxu0 %v874
  %894 = vmatprep.subr.bf16.mxu0 0
  %895 = vmatpush1.bf16.msra.mxu0 %v875
  %896 = vmatprep.subr.bf16.mxu0 0
  %897 = vmatpush1.bf16.msra.mxu0 %v876
  %898 = vmatprep.subr.bf16.mxu0 0
  %899 = vmatpush1.bf16.msra.mxu0 %v877
  %900 = vmatprep.subr.bf16.mxu0 0
  %901 = vmatpush1.bf16.msra.mxu0 %v878
  %902 = vmatprep.subr.bf16.mxu0 0
  %903 = vmatpush1.bf16.msra.mxu0 %v879
  %904 = vmatprep.subr.bf16.mxu0 0
  %905 = vmatpush1.bf16.msra.mxu0 %v880
  %906 = vmatprep.subr.bf16.mxu0 0
  %907 = vmatpush1.bf16.msra.mxu0 %v881
  %908 = vmatprep.subr.bf16.mxu0 0
  %909 = vmatpush1.bf16.msra.mxu0 %v882
  %910 = vmatprep.subr.bf16.mxu0 0
  %911 = vmatpush1.bf16.msra.mxu0 %v883
  %912 = vmatprep.subr.bf16.mxu0 0
  %913 = vmatpush1.bf16.msra.mxu0 %v884
  %914 = vmatprep.subr.bf16.mxu0 0
  %915 = vmatpush1.bf16.msra.mxu0 %v885
  %916 = vmatprep.subr.bf16.mxu0 0
  %917 = vmatpush1.bf16.msra.mxu0 %v886
  %918 = vmatprep.subr.bf16.mxu0 0
  %919 = vmatpush1.bf16.msra.mxu0 %v887
  %920 = vmatprep.mubr.bf16.mxu0 %v188
  %921 = vmatmul.mubr.bf16.gmra.mrb[0].mxu0 %v187
  %v922 = vpop.f32.mrb[0].mxu0
  %v923 = vadd.f32 0.0, %v922
  %v924 = vpop.f32.mrb[0].mxu0
  %v925 = vpop.f32.mrb[0].mxu0
  %v926 = vadd.f32 0.0, %v925
  %v927 = vpop.f32.mrb[0].mxu0
  %928 = vmatprep.mubr.bf16.mxu0 %v190
  %929 = vmatmul.mubr.bf16.gmra.mrb[0].mxu0 %v189
  %v930 = vpop.f32.mrb[0].mxu0
  %v931 = vadd.f32 0.0, %v930
  %v932 = vpop.f32.mrb[0].mxu0
  %v933 = vpop.f32.mrb[0].mxu0
  %v934 = vadd.f32 0.0, %v933
  %v935 = vpop.f32.mrb[0].mxu0
  %936 = vmatprep.mubr.bf16.mxu0 %v192
  %937 = vmatmul.mubr.bf16.gmra.mrb[0].mxu0 %v191
  %v938 = vpop.f32.mrb[0].mxu0
  %v939 = vadd.f32 0.0, %v938
  %v940 = vpop.f32.mrb[0].mxu0
  %v941 = vpop.f32.mrb[0].mxu0
  %v942 = vadd.f32 0.0, %v941
  %v943 = vpop.f32.mrb[0].mxu0
  %944 = vmatprep.mubr.bf16.mxu0 %v194
  %945 = vmatmul.mubr.bf16.gmra.mrb[0].mxu0 %v193
  %v946 = vpop.f32.mrb[0].mxu0
  %v947 = vadd.f32 0.0, %v946
  %v948 = vpop.f32.mrb[0].mxu0
  %v949 = vpop.f32.mrb[0].mxu0
  %v950 = vadd.f32 0.0, %v949
  %v951 = vpop.f32.mrb[0].mxu0
  %952 = vmatprep.mubr.bf16.mxu0 %v196
  %953 = vmatmul.mubr.bf16.gmra.mrb[0].mxu0 %v195
  %v954 = vpop.f32.mrb[0].mxu0
  %v955 = vadd.f32 0.0, %v954
  %v956 = vpop.f32.mrb[0].mxu0
  %v957 = vpop.f32.mrb[0].mxu0
  %v958 = vadd.f32 0.0, %v957
  %v959 = vpop.f32.mrb[0].mxu0
  %960 = vmatprep.mubr.bf16.mxu0 %v198
  %961 = vmatmul.mubr.bf16.gmra.mrb[0].mxu0 %v197
  %v962 = vpop.f32.mrb[0].mxu0
  %v963 = vadd.f32 0.0, %v962
  %v964 = vpop.f32.mrb[0].mxu0
  %v965 = vpop.f32.mrb[0].mxu0
  %v966 = vadd.f32 0.0, %v965
  %v967 = vpop.f32.mrb[0].mxu0
  %968 = vmatprep.mubr.bf16.mxu0 %v200
  %969 = vmatmul.mubr.bf16.gmra.mrb[0].mxu0 %v199
  %v970 = vpop.f32.mrb[0].mxu0
  %v971 = vadd.f32 0.0, %v970
  %v972 = vpop.f32.mrb[0].mxu0
  %v973 = vpop.f32.mrb[0].mxu0
  %v974 = vadd.f32 0.0, %v973
  %v975 = vpop.f32.mrb[0].mxu0
  %976 = vmatprep.mubr.bf16.mxu0 %v202
  %977 = vmatmul.mubr.bf16.gmra.mrb[0].mxu0 %v201
  %v978 = vpop.f32.mrb[0].mxu0
  %v979 = vadd.f32 0.0, %v978
  %v980 = vpop.f32.mrb[0].mxu0
  %v981 = vpop.f32.mrb[0].mxu0
  %v982 = vadd.f32 0.0, %v981
  %v983 = vpop.f32.mrb[0].mxu0
  %984 = vmatprep.mubr.bf16.mxu0 %v204
  %985 = vmatmul.mubr.bf16.gmra.mrb[0].mxu0 %v203
  %v986 = vpop.f32.mrb[0].mxu0
  %v987 = vadd.f32 0.0, %v986
  %v988 = vpop.f32.mrb[0].mxu0
  %v989 = vpop.f32.mrb[0].mxu0
  %v990 = vadd.f32 0.0, %v989
  %v991 = vpop.f32.mrb[0].mxu0
  %992 = vmatprep.mubr.bf16.mxu0 %v206
  %993 = vmatmul.mubr.bf16.gmra.mrb[0].mxu0 %v205
  %v994 = vpop.f32.mrb[0].mxu0
  %v995 = vadd.f32 0.0, %v994
  %v996 = vpop.f32.mrb[0].mxu0
  %v997 = vpop.f32.mrb[0].mxu0
  %v998 = vadd.f32 0.0, %v997
  %v999 = vpop.f32.mrb[0].mxu0
  %1000 = vmatprep.mubr.bf16.mxu0 %v208
  %1001 = vmatmul.mubr.bf16.gmra.mrb[0].mxu0 %v207
  %v1002 = vpop.f32.mrb[0].mxu0
  %v1003 = vadd.f32 0.0, %v1002
  %v1004 = vpop.f32.mrb[0].mxu0
  %v1005 = vpop.f32.mrb[0].mxu0
  %v1006 = vadd.f32 0.0, %v1005
  %v1007 = vpop.f32.mrb[0].mxu0
  %1008 = vmatprep.mubr.bf16.mxu0 %v210
  %1009 = vmatmul.mubr.bf16.gmra.mrb[0].mxu0 %v209
  %v1010 = vpop.f32.mrb[0].mxu0
  %v1011 = vadd.f32 0.0, %v1010
  %v1012 = vpop.f32.mrb[0].mxu0
  %v1013 = vpop.f32.mrb[0].mxu0
  %v1014 = vadd.f32 0.0, %v1013
  %v1015 = vpop.f32.mrb[0].mxu0
  %1016 = vmatprep.mubr.bf16.mxu0 %v212
  %1017 = vmatmul.mubr.bf16.gmra.mrb[0].mxu0 %v211
  %v1018 = vpop.f32.mrb[0].mxu0
  %v1019 = vadd.f32 0.0, %v1018
  %v1020 = vpop.f32.mrb[0].mxu0
  %v1021 = vpop.f32.mrb[0].mxu0
  %v1022 = vadd.f32 0.0, %v1021
  %v1023 = vpop.f32.mrb[0].mxu0
  %1024 = vmatprep.mubr.bf16.mxu0 %v214
  %1025 = vmatmul.mubr.bf16.gmra.mrb[0].mxu0 %v213
  %v1026 = vpop.f32.mrb[0].mxu0
  %v1027 = vadd.f32 0.0, %v1026
  %v1028 = vpop.f32.mrb[0].mxu0
  %v1029 = vpop.f32.mrb[0].mxu0
  %v1030 = vadd.f32 0.0, %v1029
  %v1031 = vpop.f32.mrb[0].mxu0
  %1032 = vmatprep.mubr.bf16.mxu0 %v216
  %1033 = vmatmul.mubr.bf16.gmra.mrb[0].mxu0 %v215
  %v1034 = vpop.f32.mrb[0].mxu0
  %v1035 = vadd.f32 0.0, %v1034
  %v1036 = vpop.f32.mrb[0].mxu0
  %v1037 = vpop.f32.mrb[0].mxu0
  %v1038 = vadd.f32 0.0, %v1037
  %v1039 = vpop.f32.mrb[0].mxu0
  %1040 = vmatprep.mubr.bf16.mxu0 %v218
  %1041 = vmatmul.mubr.bf16.gmra.mrb[0].mxu0 %v217
  %v1042 = vpop.f32.mrb[0].mxu0
  %v1043 = vadd.f32 0.0, %v1042
  %v1044 = vpop.f32.mrb[0].mxu0
  %v1045 = vpop.f32.mrb[0].mxu0
  %v1046 = vadd.f32 0.0, %v1045
  %v1047 = vpop.f32.mrb[0].mxu0
  %1048 = vdwg.mxu0
  %v1049 = vld [vmem:[%s4] sm:$0xff]
  %v1050 = vld [vmem:[%s4 + $0x8] sm:$0xff]
  %v1051 = vld [vmem:[%s4 + $0x10] sm:$0xff]
  %v1052 = vld [vmem:[%s4 + $0x18] sm:$0xff]
  %v1053 = vld [vmem:[%s4 + $0x20] sm:$0x1]
  %v1054 = vlaneseq
  %v1055 = vshrl.u32 %v1054, 7
  %v1056 = vsub.s32 0, %v1055
  %v1057 = vrot.slane %v1053, %v1056
  %vm1058 = vcmask 261120
  %v1060 = vsel %vm1058, %v923, 0
  %v1063 = vsel %vm1058, %v926, 0
  %v1066 = vsel %vm1058, %v931, 0
  %v1069 = vsel %vm1058, %v934, 0
  %v1072 = vsel %vm1058, %v939, 0
  %v1075 = vsel %vm1058, %v942, 0
  %v1078 = vsel %vm1058, %v947, 0
  %v1081 = vsel %vm1058, %v950, 0
  %v1084 = vsel %vm1058, %v955, 0
  %v1087 = vsel %vm1058, %v958, 0
  %v1090 = vsel %vm1058, %v963, 0
  %v1093 = vsel %vm1058, %v966, 0
  %v1096 = vsel %vm1058, %v971, 0
  %v1099 = vsel %vm1058, %v974, 0
  %v1102 = vsel %vm1058, %v979, 0
  %v1105 = vsel %vm1058, %v982, 0
  %v1108 = vsel %vm1058, %v987, 0
  %v1111 = vsel %vm1058, %v990, 0
  %v1114 = vsel %vm1058, %v995, 0
  %v1117 = vsel %vm1058, %v998, 0
  %v1120 = vsel %vm1058, %v1003, 0
  %v1123 = vsel %vm1058, %v1006, 0
  %v1126 = vsel %vm1058, %v1011, 0
  %v1129 = vsel %vm1058, %v1014, 0
  %v1132 = vsel %vm1058, %v1019, 0
  %v1135 = vsel %vm1058, %v1022, 0
  %v1138 = vsel %vm1058, %v1027, 0
  %v1141 = vsel %vm1058, %v1030, 0
  %v1144 = vsel %vm1058, %v1035, 0
  %v1147 = vsel %vm1058, %v1038, 0
  %v1150 = vsel %vm1058, %v1043, 0
  %v1153 = vsel %vm1058, %v1046, 0
  %1155 = vmatprep.subr.mxu0 0.0
  %1156 = vmatpush1.msra.mxu0 %v1049
  %1157 = vmatprep.subr.mxu0 0.0
  %1158 = vmatpush1.msra.mxu0 %v1050
  %1159 = vmatprep.subr.mxu0 0.0
  %1160 = vmatpush1.msra.mxu0 %v1051
  %1161 = vmatprep.subr.mxu0 0.0
  %1162 = vmatpush1.msra.mxu0 %v1052
  %1163 = vmatprep.subr.mxu0 0.0
  %1164 = vmatpush1.msra.mxu0 0.0
  %1165 = vmatprep.subr.mxu0 0.0
  %1166 = vmatpush1.msra.mxu0 0.0
  %1167 = vmatprep.subr.mxu0 0.0
  %1168 = vmatpush1.msra.mxu0 0.0
  %1169 = vmatprep.subr.mxu0 0.0
  %1170 = vmatpush1.msra.mxu0 0.0
  %1171 = vmatprep.subr.mxu0 0.0
  %1172 = vmatpush1.msra.mxu0 0.0
  %1173 = vmatprep.subr.mxu0 0.0
  %1174 = vmatpush1.msra.mxu0 0.0
  %1175 = vmatprep.subr.mxu0 0.0
  %1176 = vmatpush1.msra.mxu0 0.0
  %1177 = vmatprep.subr.mxu0 0.0
  %1178 = vmatpush1.msra.mxu0 0.0
  %1179 = vmatprep.subr.mxu0 0.0
  %1180 = vmatpush1.msra.mxu0 0.0
  %1181 = vmatprep.subr.mxu0 0.0
  %1182 = vmatpush1.msra.mxu0 0.0
  %1183 = vmatprep.subr.mxu0 0.0
  %1184 = vmatpush1.msra.mxu0 0.0
  %1185 = vmatprep.subr.mxu0 0.0
  %1186 = vmatpush1.msra.mxu0 0.0
  %1187 = vmatprep.subr.mxu0 0.0
  %1188 = vmatpush1.msra.mxu0 0.0
  %1189 = vmatprep.subr.mxu0 0.0
  %1190 = vmatpush1.msra.mxu0 0.0
  %1191 = vmatprep.subr.mxu0 0.0
  %1192 = vmatpush1.msra.mxu0 0.0
  %1193 = vmatprep.subr.mxu0 0.0
  %1194 = vmatpush1.msra.mxu0 0.0
  %1195 = vmatprep.subr.mxu0 0.0
  %1196 = vmatpush1.msra.mxu0 0.0
  %1197 = vmatprep.subr.mxu0 0.0
  %1198 = vmatpush1.msra.mxu0 0.0
  %1199 = vmatprep.subr.mxu0 0.0
  %1200 = vmatpush1.msra.mxu0 0.0
  %1201 = vmatprep.subr.mxu0 0.0
  %1202 = vmatpush1.msra.mxu0 0.0
  %1203 = vmatprep.subr.mxu0 0.0
  %1204 = vmatpush1.msra.mxu0 0.0
  %1205 = vmatprep.subr.mxu0 0.0
  %1206 = vmatpush1.msra.mxu0 0.0
  %1207 = vmatprep.subr.mxu0 0.0
  %1208 = vmatpush1.msra.mxu0 0.0
  %1209 = vmatprep.subr.mxu0 0.0
  %1210 = vmatpush1.msra.mxu0 0.0
  %1211 = vmatprep.subr.mxu0 0.0
  %1212 = vmatpush1.msra.mxu0 0.0
  %1213 = vmatprep.subr.mxu0 0.0
  %1214 = vmatpush1.msra.mxu0 0.0
  %1215 = vmatprep.subr.mxu0 0.0
  %1216 = vmatpush1.msra.mxu0 0.0
  %1217 = vmatprep.subr.mxu0 0.0
  %1218 = vmatpush1.msra.mxu0 0.0
  %1219 = vmatprep.mubr.f32.mxu0 0.0
  %1220 = vmatmul.mubr.f32.gmra.mrb[0].mxu0 %v1060
  %v1221 = vpop.f32.mrb[0].mxu0
  %v1222 = vadd.f32 %v1057, %v1221
  %v1223 = vpop.f32.mrb[0].mxu0
  %1224 = vmatprep.mubr.f32.mxu0 0.0
  %1225 = vmatmul.mubr.f32.gmra.mrb[0].mxu0 %v1063
  %v1226 = vpop.f32.mrb[0].mxu0
  %v1227 = vadd.f32 %v1057, %v1226
  %v1228 = vpop.f32.mrb[0].mxu0
  %1229 = vmatprep.mubr.f32.mxu0 0.0
  %1230 = vmatmul.mubr.f32.gmra.mrb[0].mxu0 %v1066
  %v1231 = vpop.f32.mrb[0].mxu0
  %v1232 = vadd.f32 %v1057, %v1231
  %v1233 = vpop.f32.mrb[0].mxu0
  %1234 = vmatprep.mubr.f32.mxu0 0.0
  %1235 = vmatmul.mubr.f32.gmra.mrb[0].mxu0 %v1069
  %v1236 = vpop.f32.mrb[0].mxu0
  %v1237 = vadd.f32 %v1057, %v1236
  %v1238 = vpop.f32.mrb[0].mxu0
  %1239 = vmatprep.mubr.f32.mxu0 0.0
  %1240 = vmatmul.mubr.f32.gmra.mrb[0].mxu0 %v1072
  %v1241 = vpop.f32.mrb[0].mxu0
  %v1242 = vadd.f32 %v1057, %v1241
  %v1243 = vpop.f32.mrb[0].mxu0
  %1244 = vmatprep.mubr.f32.mxu0 0.0
  %1245 = vmatmul.mubr.f32.gmra.mrb[0].mxu0 %v1075
  %v1246 = vpop.f32.mrb[0].mxu0
  %v1247 = vadd.f32 %v1057, %v1246
  %v1248 = vpop.f32.mrb[0].mxu0
  %1249 = vmatprep.mubr.f32.mxu0 0.0
  %1250 = vmatmul.mubr.f32.gmra.mrb[0].mxu0 %v1078
  %v1251 = vpop.f32.mrb[0].mxu0
  %v1252 = vadd.f32 %v1057, %v1251
  %v1253 = vpop.f32.mrb[0].mxu0
  %1254 = vmatprep.mubr.f32.mxu0 0.0
  %1255 = vmatmul.mubr.f32.gmra.mrb[0].mxu0 %v1081
  %v1256 = vpop.f32.mrb[0].mxu0
  %v1257 = vadd.f32 %v1057, %v1256
  %v1258 = vpop.f32.mrb[0].mxu0
  %1259 = vmatprep.mubr.f32.mxu0 0.0
  %1260 = vmatmul.mubr.f32.gmra.mrb[0].mxu0 %v1084
  %v1261 = vpop.f32.mrb[0].mxu0
  %v1262 = vadd.f32 %v1057, %v1261
  %v1263 = vpop.f32.mrb[0].mxu0
  %1264 = vmatprep.mubr.f32.mxu0 0.0
  %1265 = vmatmul.mubr.f32.gmra.mrb[0].mxu0 %v1087
  %v1266 = vpop.f32.mrb[0].mxu0
  %v1267 = vadd.f32 %v1057, %v1266
  %v1268 = vpop.f32.mrb[0].mxu0
  %1269 = vmatprep.mubr.f32.mxu0 0.0
  %1270 = vmatmul.mubr.f32.gmra.mrb[0].mxu0 %v1090
  %v1271 = vpop.f32.mrb[0].mxu0
  %v1272 = vadd.f32 %v1057, %v1271
  %v1273 = vpop.f32.mrb[0].mxu0
  %1274 = vmatprep.mubr.f32.mxu0 0.0
  %1275 = vmatmul.mubr.f32.gmra.mrb[0].mxu0 %v1093
  %v1276 = vpop.f32.mrb[0].mxu0
  %v1277 = vadd.f32 %v1057, %v1276
  %v1278 = vpop.f32.mrb[0].mxu0
  %1279 = vmatprep.mubr.f32.mxu0 0.0
  %1280 = vmatmul.mubr.f32.gmra.mrb[0].mxu0 %v1096
  %v1281 = vpop.f32.mrb[0].mxu0
  %v1282 = vadd.f32 %v1057, %v1281
  %v1283 = vpop.f32.mrb[0].mxu0
  %1284 = vmatprep.mubr.f32.mxu0 0.0
  %1285 = vmatmul.mubr.f32.gmra.mrb[0].mxu0 %v1099
  %v1286 = vpop.f32.mrb[0].mxu0
  %v1287 = vadd.f32 %v1057, %v1286
  %v1288 = vpop.f32.mrb[0].mxu0
  %1289 = vmatprep.mubr.f32.mxu0 0.0
  %1290 = vmatmul.mubr.f32.gmra.mrb[0].mxu0 %v1102
  %v1291 = vpop.f32.mrb[0].mxu0
  %v1292 = vadd.f32 %v1057, %v1291
  %v1293 = vpop.f32.mrb[0].mxu0
  %1294 = vmatprep.mubr.f32.mxu0 0.0
  %1295 = vmatmul.mubr.f32.gmra.mrb[0].mxu0 %v1105
  %v1296 = vpop.f32.mrb[0].mxu0
  %v1297 = vadd.f32 %v1057, %v1296
  %v1298 = vpop.f32.mrb[0].mxu0
  %1299 = vmatprep.mubr.f32.mxu0 0.0
  %1300 = vmatmul.mubr.f32.gmra.mrb[0].mxu0 %v1108
  %v1301 = vpop.f32.mrb[0].mxu0
  %v1302 = vadd.f32 %v1057, %v1301
  %v1303 = vpop.f32.mrb[0].mxu0
  %1304 = vmatprep.mubr.f32.mxu0 0.0
  %1305 = vmatmul.mubr.f32.gmra.mrb[0].mxu0 %v1111
  %v1306 = vpop.f32.mrb[0].mxu0
  %v1307 = vadd.f32 %v1057, %v1306
  %v1308 = vpop.f32.mrb[0].mxu0
  %1309 = vmatprep.mubr.f32.mxu0 0.0
  %1310 = vmatmul.mubr.f32.gmra.mrb[0].mxu0 %v1114
  %v1311 = vpop.f32.mrb[0].mxu0
  %v1312 = vadd.f32 %v1057, %v1311
  %v1313 = vpop.f32.mrb[0].mxu0
  %1314 = vmatprep.mubr.f32.mxu0 0.0
  %1315 = vmatmul.mubr.f32.gmra.mrb[0].mxu0 %v1117
  %v1316 = vpop.f32.mrb[0].mxu0
  %v1317 = vadd.f32 %v1057, %v1316
  %v1318 = vpop.f32.mrb[0].mxu0
  %1319 = vmatprep.mubr.f32.mxu0 0.0
  %1320 = vmatmul.mubr.f32.gmra.mrb[0].mxu0 %v1120
  %v1321 = vpop.f32.mrb[0].mxu0
  %v1322 = vadd.f32 %v1057, %v1321
  %v1323 = vpop.f32.mrb[0].mxu0
  %1324 = vmatprep.mubr.f32.mxu0 0.0
  %1325 = vmatmul.mubr.f32.gmra.mrb[0].mxu0 %v1123
  %v1326 = vpop.f32.mrb[0].mxu0
  %v1327 = vadd.f32 %v1057, %v1326
  %v1328 = vpop.f32.mrb[0].mxu0
  %1329 = vmatprep.mubr.f32.mxu0 0.0
  %1330 = vmatmul.mubr.f32.gmra.mrb[0].mxu0 %v1126
  %v1331 = vpop.f32.mrb[0].mxu0
  %v1332 = vadd.f32 %v1057, %v1331
  %v1333 = vpop.f32.mrb[0].mxu0
  %1334 = vmatprep.mubr.f32.mxu0 0.0
  %1335 = vmatmul.mubr.f32.gmra.mrb[0].mxu0 %v1129
  %v1336 = vpop.f32.mrb[0].mxu0
  %v1337 = vadd.f32 %v1057, %v1336
  %v1338 = vpop.f32.mrb[0].mxu0
  %1339 = vmatprep.mubr.f32.mxu0 0.0
  %1340 = vmatmul.mubr.f32.gmra.mrb[0].mxu0 %v1132
  %v1341 = vpop.f32.mrb[0].mxu0
  %v1342 = vadd.f32 %v1057, %v1341
  %v1343 = vpop.f32.mrb[0].mxu0
  %1344 = vmatprep.mubr.f32.mxu0 0.0
  %1345 = vmatmul.mubr.f32.gmra.mrb[0].mxu0 %v1135
  %v1346 = vpop.f32.mrb[0].mxu0
  %v1347 = vadd.f32 %v1057, %v1346
  %v1348 = vpop.f32.mrb[0].mxu0
  %1349 = vmatprep.mubr.f32.mxu0 0.0
  %1350 = vmatmul.mubr.f32.gmra.mrb[0].mxu0 %v1138
  %v1351 = vpop.f32.mrb[0].mxu0
  %v1352 = vadd.f32 %v1057, %v1351
  %v1353 = vpop.f32.mrb[0].mxu0
  %1354 = vmatprep.mubr.f32.mxu0 0.0
  %1355 = vmatmul.mubr.f32.gmra.mrb[0].mxu0 %v1141
  %v1356 = vpop.f32.mrb[0].mxu0
  %v1357 = vadd.f32 %v1057, %v1356
  %v1358 = vpop.f32.mrb[0].mxu0
  %1359 = vmatprep.mubr.f32.mxu0 0.0
  %1360 = vmatmul.mubr.f32.gmra.mrb[0].mxu0 %v1144
  %v1361 = vpop.f32.mrb[0].mxu0
  %v1362 = vadd.f32 %v1057, %v1361
  %v1363 = vpop.f32.mrb[0].mxu0
  %1364 = vmatprep.mubr.f32.mxu0 0.0
  %1365 = vmatmul.mubr.f32.gmra.mrb[0].mxu0 %v1147
  %v1366 = vpop.f32.mrb[0].mxu0
  %v1367 = vadd.f32 %v1057, %v1366
  %v1368 = vpop.f32.mrb[0].mxu0
  %1369 = vmatprep.mubr.f32.mxu0 0.0
  %1370 = vmatmul.mubr.f32.gmra.mrb[0].mxu0 %v1150
  %v1371 = vpop.f32.mrb[0].mxu0
  %v1372 = vadd.f32 %v1057, %v1371
  %v1373 = vpop.f32.mrb[0].mxu0
  %1374 = vmatprep.mubr.f32.mxu0 0.0
  %1375 = vmatmul.mubr.f32.gmra.mrb[0].mxu0 %v1153
  %v1376 = vpop.f32.mrb[0].mxu0
  %v1377 = vadd.f32 %v1057, %v1376
  %v1378 = vpop.f32.mrb[0].mxu0
  %1379 = vdwg.mxu0
  %v1380 = vmax.f32 %v1222, 0.0
  %v1381 = vmax.f32 %v1227, 0.0
  %v1382 = vmax.f32 %v1232, 0.0
  %v1383 = vmax.f32 %v1237, 0.0
  %v1384 = vmax.f32 %v1242, 0.0
  %v1385 = vmax.f32 %v1247, 0.0
  %v1386 = vmax.f32 %v1252, 0.0
  %v1387 = vmax.f32 %v1257, 0.0
  %v1388 = vmax.f32 %v1262, 0.0
  %v1389 = vmax.f32 %v1267, 0.0
  %v1390 = vmax.f32 %v1272, 0.0
  %v1391 = vmax.f32 %v1277, 0.0
  %v1392 = vmax.f32 %v1282, 0.0
  %v1393 = vmax.f32 %v1287, 0.0
  %v1394 = vmax.f32 %v1292, 0.0
  %v1395 = vmax.f32 %v1297, 0.0
  %v1396 = vmax.f32 %v1302, 0.0
  %v1397 = vmax.f32 %v1307, 0.0
  %v1398 = vmax.f32 %v1312, 0.0
  %v1399 = vmax.f32 %v1317, 0.0
  %v1400 = vmax.f32 %v1322, 0.0
  %v1401 = vmax.f32 %v1327, 0.0
  %v1402 = vmax.f32 %v1332, 0.0
  %v1403 = vmax.f32 %v1337, 0.0
  %v1404 = vmax.f32 %v1342, 0.0
  %v1405 = vmax.f32 %v1347, 0.0
  %v1406 = vmax.f32 %v1352, 0.0
  %v1407 = vmax.f32 %v1357, 0.0
  %v1408 = vmax.f32 %v1362, 0.0
  %v1409 = vmax.f32 %v1367, 0.0
  %v1410 = vmax.f32 %v1372, 0.0
  %v1411 = vmax.f32 %v1377, 0.0
  %v1412 = vpack.c.bf16 %v1381, %v1380
  %v1413 = vpack.c.bf16 %v1383, %v1382
  %v1414 = vpack.c.bf16 %v1385, %v1384
  %v1415 = vpack.c.bf16 %v1387, %v1386
  %v1416 = vpack.c.bf16 %v1389, %v1388
  %v1417 = vpack.c.bf16 %v1391, %v1390
  %v1418 = vpack.c.bf16 %v1393, %v1392
  %v1419 = vpack.c.bf16 %v1395, %v1394
  %v1420 = vpack.c.bf16 %v1397, %v1396
  %v1421 = vpack.c.bf16 %v1399, %v1398
  %v1422 = vpack.c.bf16 %v1401, %v1400
  %v1423 = vpack.c.bf16 %v1403, %v1402
  %v1424 = vpack.c.bf16 %v1405, %v1404
  %v1425 = vpack.c.bf16 %v1407, %v1406
  %v1426 = vpack.c.bf16 %v1409, %v1408
  %v1427 = vpack.c.bf16 %v1411, %v1410
  %1428 = vmatprep.subr.bf16.mxu0 0
  %1429 = vmatpush1.bf16.msra.mxu0 %v1412
  %1430 = vmatprep.subr.bf16.mxu0 0
  %1431 = vmatpush1.bf16.msra.mxu0 %v1413
  %1432 = vmatprep.subr.bf16.mxu0 0
  %1433 = vmatpush1.bf16.msra.mxu0 %v1414
  %1434 = vmatprep.subr.bf16.mxu0 0
  %1435 = vmatpush1.bf16.msra.mxu0 %v1415
  %1436 = vmatprep.subr.bf16.mxu0 0
  %1437 = vmatpush1.bf16.msra.mxu0 %v1416
  %1438 = vmatprep.subr.bf16.mxu0 0
  %1439 = vmatpush1.bf16.msra.mxu0 %v1417
  %1440 = vmatprep.subr.bf16.mxu0 0
  %1441 = vmatpush1.bf16.msra.mxu0 %v1418
  %1442 = vmatprep.subr.bf16.mxu0 0
  %1443 = vmatpush1.bf16.msra.mxu0 %v1419
  %1444 = vmatprep.subr.bf16.mxu0 0
  %1445 = vmatpush1.bf16.msra.mxu0 %v1420
  %1446 = vmatprep.subr.bf16.mxu0 0
  %1447 = vmatpush1.bf16.msra.mxu0 %v1421
  %1448 = vmatprep.subr.bf16.mxu0 0
  %1449 = vmatpush1.bf16.msra.mxu0 %v1422
  %1450 = vmatprep.subr.bf16.mxu0 0
  %1451 = vmatpush1.bf16.msra.mxu0 %v1423
  %1452 = vmatprep.subr.bf16.mxu0 0
  %1453 = vmatpush1.bf16.msra.mxu0 %v1424
  %1454 = vmatprep.subr.bf16.mxu0 0
  %1455 = vmatpush1.bf16.msra.mxu0 %v1425
  %1456 = vmatprep.subr.bf16.mxu0 0
  %1457 = vmatpush1.bf16.msra.mxu0 %v1426
  %1458 = vmatprep.subr.bf16.mxu0 0
  %1459 = vmatpush1.bf16.msra.mxu0 %v1427
  %1460 = vmatprep.mubr.bf16.mxu0 %v188
  %1461 = vmatmul.mubr.bf16.gmra.mrb[0].mxu0 %v187
  %v1462 = vpop.f32.mrb[0].mxu0
  %v1463 = vadd.f32 0.0, %v1462
  %v1464 = vpop.f32.mrb[0].mxu0
  %v1465 = vpop.f32.mrb[0].mxu0
  %v1466 = vadd.f32 0.0, %v1465
  %v1467 = vpop.f32.mrb[0].mxu0
  %1468 = vmatprep.mubr.bf16.mxu0 %v190
  %1469 = vmatmul.mubr.bf16.gmra.mrb[0].mxu0 %v189
  %v1470 = vpop.f32.mrb[0].mxu0
  %v1471 = vadd.f32 0.0, %v1470
  %v1472 = vpop.f32.mrb[0].mxu0
  %v1473 = vpop.f32.mrb[0].mxu0
  %v1474 = vadd.f32 0.0, %v1473
  %v1475 = vpop.f32.mrb[0].mxu0
  %1476 = vmatprep.mubr.bf16.mxu0 %v192
  %1477 = vmatmul.mubr.bf16.gmra.mrb[0].mxu0 %v191
  %v1478 = vpop.f32.mrb[0].mxu0
  %v1479 = vadd.f32 0.0, %v1478
  %v1480 = vpop.f32.mrb[0].mxu0
  %v1481 = vpop.f32.mrb[0].mxu0
  %v1482 = vadd.f32 0.0, %v1481
  %v1483 = vpop.f32.mrb[0].mxu0
  %1484 = vmatprep.mubr.bf16.mxu0 %v194
  %1485 = vmatmul.mubr.bf16.gmra.mrb[0].mxu0 %v193
  %v1486 = vpop.f32.mrb[0].mxu0
  %v1487 = vadd.f32 0.0, %v1486
  %v1488 = vpop.f32.mrb[0].mxu0
  %v1489 = vpop.f32.mrb[0].mxu0
  %v1490 = vadd.f32 0.0, %v1489
  %v1491 = vpop.f32.mrb[0].mxu0
  %1492 = vmatprep.mubr.bf16.mxu0 %v196
  %1493 = vmatmul.mubr.bf16.gmra.mrb[0].mxu0 %v195
  %v1494 = vpop.f32.mrb[0].mxu0
  %v1495 = vadd.f32 0.0, %v1494
  %v1496 = vpop.f32.mrb[0].mxu0
  %v1497 = vpop.f32.mrb[0].mxu0
  %v1498 = vadd.f32 0.0, %v1497
  %v1499 = vpop.f32.mrb[0].mxu0
  %1500 = vmatprep.mubr.bf16.mxu0 %v198
  %1501 = vmatmul.mubr.bf16.gmra.mrb[0].mxu0 %v197
  %v1502 = vpop.f32.mrb[0].mxu0
  %v1503 = vadd.f32 0.0, %v1502
  %v1504 = vpop.f32.mrb[0].mxu0
  %v1505 = vpop.f32.mrb[0].mxu0
  %v1506 = vadd.f32 0.0, %v1505
  %v1507 = vpop.f32.mrb[0].mxu0
  %1508 = vmatprep.mubr.bf16.mxu0 %v200
  %1509 = vmatmul.mubr.bf16.gmra.mrb[0].mxu0 %v199
  %v1510 = vpop.f32.mrb[0].mxu0
  %v1511 = vadd.f32 0.0, %v1510
  %v1512 = vpop.f32.mrb[0].mxu0
  %v1513 = vpop.f32.mrb[0].mxu0
  %v1514 = vadd.f32 0.0, %v1513
  %v1515 = vpop.f32.mrb[0].mxu0
  %1516 = vmatprep.mubr.bf16.mxu0 %v202
  %1517 = vmatmul.mubr.bf16.gmra.mrb[0].mxu0 %v201
  %v1518 = vpop.f32.mrb[0].mxu0
  %v1519 = vadd.f32 0.0, %v1518
  %v1520 = vpop.f32.mrb[0].mxu0
  %v1521 = vpop.f32.mrb[0].mxu0
  %v1522 = vadd.f32 0.0, %v1521
  %v1523 = vpop.f32.mrb[0].mxu0
  %1524 = vmatprep.mubr.bf16.mxu0 %v204
  %1525 = vmatmul.mubr.bf16.gmra.mrb[0].mxu0 %v203
  %v1526 = vpop.f32.mrb[0].mxu0
  %v1527 = vadd.f32 0.0, %v1526
  %v1528 = vpop.f32.mrb[0].mxu0
  %v1529 = vpop.f32.mrb[0].mxu0
  %v1530 = vadd.f32 0.0, %v1529
  %v1531 = vpop.f32.mrb[0].mxu0
  %1532 = vmatprep.mubr.bf16.mxu0 %v206
  %1533 = vmatmul.mubr.bf16.gmra.mrb[0].mxu0 %v205
  %v1534 = vpop.f32.mrb[0].mxu0
  %v1535 = vadd.f32 0.0, %v1534
  %v1536 = vpop.f32.mrb[0].mxu0
  %v1537 = vpop.f32.mrb[0].mxu0
  %v1538 = vadd.f32 0.0, %v1537
  %v1539 = vpop.f32.mrb[0].mxu0
  %1540 = vmatprep.mubr.bf16.mxu0 %v208
  %1541 = vmatmul.mubr.bf16.gmra.mrb[0].mxu0 %v207
  %v1542 = vpop.f32.mrb[0].mxu0
  %v1543 = vadd.f32 0.0, %v1542
  %v1544 = vpop.f32.mrb[0].mxu0
  %v1545 = vpop.f32.mrb[0].mxu0
  %v1546 = vadd.f32 0.0, %v1545
  %v1547 = vpop.f32.mrb[0].mxu0
  %1548 = vmatprep.mubr.bf16.mxu0 %v210
  %1549 = vmatmul.mubr.bf16.gmra.mrb[0].mxu0 %v209
  %v1550 = vpop.f32.mrb[0].mxu0
  %v1551 = vadd.f32 0.0, %v1550
  %v1552 = vpop.f32.mrb[0].mxu0
  %v1553 = vpop.f32.mrb[0].mxu0
  %v1554 = vadd.f32 0.0, %v1553
  %v1555 = vpop.f32.mrb[0].mxu0
  %1556 = vmatprep.mubr.bf16.mxu0 %v212
  %1557 = vmatmul.mubr.bf16.gmra.mrb[0].mxu0 %v211
  %v1558 = vpop.f32.mrb[0].mxu0
  %v1559 = vadd.f32 0.0, %v1558
  %v1560 = vpop.f32.mrb[0].mxu0
  %v1561 = vpop.f32.mrb[0].mxu0
  %v1562 = vadd.f32 0.0, %v1561
  %v1563 = vpop.f32.mrb[0].mxu0
  %1564 = vmatprep.mubr.bf16.mxu0 %v214
  %1565 = vmatmul.mubr.bf16.gmra.mrb[0].mxu0 %v213
  %v1566 = vpop.f32.mrb[0].mxu0
  %v1567 = vadd.f32 0.0, %v1566
  %v1568 = vpop.f32.mrb[0].mxu0
  %v1569 = vpop.f32.mrb[0].mxu0
  %v1570 = vadd.f32 0.0, %v1569
  %v1571 = vpop.f32.mrb[0].mxu0
  %1572 = vmatprep.mubr.bf16.mxu0 %v216
  %1573 = vmatmul.mubr.bf16.gmra.mrb[0].mxu0 %v215
  %v1574 = vpop.f32.mrb[0].mxu0
  %v1575 = vadd.f32 0.0, %v1574
  %v1576 = vpop.f32.mrb[0].mxu0
  %v1577 = vpop.f32.mrb[0].mxu0
  %v1578 = vadd.f32 0.0, %v1577
  %v1579 = vpop.f32.mrb[0].mxu0
  %1580 = vmatprep.mubr.bf16.mxu0 %v218
  %1581 = vmatmul.mubr.bf16.gmra.mrb[0].mxu0 %v217
  %v1582 = vpop.f32.mrb[0].mxu0
  %v1583 = vadd.f32 0.0, %v1582
  %v1584 = vpop.f32.mrb[0].mxu0
  %v1585 = vpop.f32.mrb[0].mxu0
  %v1586 = vadd.f32 0.0, %v1585
  %v1587 = vpop.f32.mrb[0].mxu0
  %1588 = vdwg.mxu0
  %v1589 = vld [vmem:[%s5] sm:$0xff]
  %v1590 = vld [vmem:[%s5 + $0x8] sm:$0xff]
  %v1591 = vld [vmem:[%s5 + $0x10] sm:$0xff]
  %v1592 = vld [vmem:[%s5 + $0x18] sm:$0xff]
  %v1593 = vld [vmem:[%s5 + $0x20] sm:$0x1]
  %v1594 = vlaneseq
  %v1595 = vshrl.u32 %v1594, 7
  %v1596 = vsub.s32 0, %v1595
  %v1597 = vrot.slane %v1593, %v1596
  %v1599 = vsel %vm1058, %v1463, 0
  %v1602 = vsel %vm1058, %v1466, 0
  %v1605 = vsel %vm1058, %v1471, 0
  %v1608 = vsel %vm1058, %v1474, 0
  %v1611 = vsel %vm1058, %v1479, 0
  %v1614 = vsel %vm1058, %v1482, 0
  %v1617 = vsel %vm1058, %v1487, 0
  %v1620 = vsel %vm1058, %v1490, 0
  %v1623 = vsel %vm1058, %v1495, 0
  %v1626 = vsel %vm1058, %v1498, 0
  %v1629 = vsel %vm1058, %v1503, 0
  %v1632 = vsel %vm1058, %v1506, 0
  %v1635 = vsel %vm1058, %v1511, 0
  %v1638 = vsel %vm1058, %v1514, 0
  %v1641 = vsel %vm1058, %v1519, 0
  %v1644 = vsel %vm1058, %v1522, 0
  %v1647 = vsel %vm1058, %v1527, 0
  %v1650 = vsel %vm1058, %v1530, 0
  %v1653 = vsel %vm1058, %v1535, 0
  %v1656 = vsel %vm1058, %v1538, 0
  %v1659 = vsel %vm1058, %v1543, 0
  %v1662 = vsel %vm1058, %v1546, 0
  %v1665 = vsel %vm1058, %v1551, 0
  %v1668 = vsel %vm1058, %v1554, 0
  %v1671 = vsel %vm1058, %v1559, 0
  %v1674 = vsel %vm1058, %v1562, 0
  %v1677 = vsel %vm1058, %v1567, 0
  %v1680 = vsel %vm1058, %v1570, 0
  %v1683 = vsel %vm1058, %v1575, 0
  %v1686 = vsel %vm1058, %v1578, 0
  %v1689 = vsel %vm1058, %v1583, 0
  %v1692 = vsel %vm1058, %v1586, 0
  %1694 = vmatprep.subr.mxu0 0.0
  %1695 = vmatpush1.msra.mxu0 %v1589
  %1696 = vmatprep.subr.mxu0 0.0
  %1697 = vmatpush1.msra.mxu0 %v1590
  %1698 = vmatprep.subr.mxu0 0.0
  %1699 = vmatpush1.msra.mxu0 %v1591
  %1700 = vmatprep.subr.mxu0 0.0
  %1701 = vmatpush1.msra.mxu0 %v1592
  %1702 = vmatprep.subr.mxu0 0.0
  %1703 = vmatpush1.msra.mxu0 0.0
  %1704 = vmatprep.subr.mxu0 0.0
  %1705 = vmatpush1.msra.mxu0 0.0
  %1706 = vmatprep.subr.mxu0 0.0
  %1707 = vmatpush1.msra.mxu0 0.0
  %1708 = vmatprep.subr.mxu0 0.0
  %1709 = vmatpush1.msra.mxu0 0.0
  %1710 = vmatprep.subr.mxu0 0.0
  %1711 = vmatpush1.msra.mxu0 0.0
  %1712 = vmatprep.subr.mxu0 0.0
  %1713 = vmatpush1.msra.mxu0 0.0
  %1714 = vmatprep.subr.mxu0 0.0
  %1715 = vmatpush1.msra.mxu0 0.0
  %1716 = vmatprep.subr.mxu0 0.0
  %1717 = vmatpush1.msra.mxu0 0.0
  %1718 = vmatprep.subr.mxu0 0.0
  %1719 = vmatpush1.msra.mxu0 0.0
  %1720 = vmatprep.subr.mxu0 0.0
  %1721 = vmatpush1.msra.mxu0 0.0
  %1722 = vmatprep.subr.mxu0 0.0
  %1723 = vmatpush1.msra.mxu0 0.0
  %1724 = vmatprep.subr.mxu0 0.0
  %1725 = vmatpush1.msra.mxu0 0.0
  %1726 = vmatprep.subr.mxu0 0.0
  %1727 = vmatpush1.msra.mxu0 0.0
  %1728 = vmatprep.subr.mxu0 0.0
  %1729 = vmatpush1.msra.mxu0 0.0
  %1730 = vmatprep.subr.mxu0 0.0
  %1731 = vmatpush1.msra.mxu0 0.0
  %1732 = vmatprep.subr.mxu0 0.0
  %1733 = vmatpush1.msra.mxu0 0.0
  %1734 = vmatprep.subr.mxu0 0.0
  %1735 = vmatpush1.msra.mxu0 0.0
  %1736 = vmatprep.subr.mxu0 0.0
  %1737 = vmatpush1.msra.mxu0 0.0
  %1738 = vmatprep.subr.mxu0 0.0
  %1739 = vmatpush1.msra.mxu0 0.0
  %1740 = vmatprep.subr.mxu0 0.0
  %1741 = vmatpush1.msra.mxu0 0.0
  %1742 = vmatprep.subr.mxu0 0.0
  %1743 = vmatpush1.msra.mxu0 0.0
  %1744 = vmatprep.subr.mxu0 0.0
  %1745 = vmatpush1.msra.mxu0 0.0
  %1746 = vmatprep.subr.mxu0 0.0
  %1747 = vmatpush1.msra.mxu0 0.0
  %1748 = vmatprep.subr.mxu0 0.0
  %1749 = vmatpush1.msra.mxu0 0.0
  %1750 = vmatprep.subr.mxu0 0.0
  %1751 = vmatpush1.msra.mxu0 0.0
  %1752 = vmatprep.subr.mxu0 0.0
  %1753 = vmatpush1.msra.mxu0 0.0
  %1754 = vmatprep.subr.mxu0 0.0
  %1755 = vmatpush1.msra.mxu0 0.0
  %1756 = vmatprep.subr.mxu0 0.0
  %1757 = vmatpush1.msra.mxu0 0.0
  %1758 = vmatprep.mubr.f32.mxu0 0.0
  %1759 = vmatmul.mubr.f32.gmra.mrb[0].mxu0 %v1599
  %v1760 = vpop.f32.mrb[0].mxu0
  %v1761 = vadd.f32 %v1597, %v1760
  %v1762 = vpop.f32.mrb[0].mxu0
  %1763 = vmatprep.mubr.f32.mxu0 0.0
  %1764 = vmatmul.mubr.f32.gmra.mrb[0].mxu0 %v1602
  %v1765 = vpop.f32.mrb[0].mxu0
  %v1766 = vadd.f32 %v1597, %v1765
  %v1767 = vpop.f32.mrb[0].mxu0
  %1768 = vmatprep.mubr.f32.mxu0 0.0
  %1769 = vmatmul.mubr.f32.gmra.mrb[0].mxu0 %v1605
  %v1770 = vpop.f32.mrb[0].mxu0
  %v1771 = vadd.f32 %v1597, %v1770
  %v1772 = vpop.f32.mrb[0].mxu0
  %1773 = vmatprep.mubr.f32.mxu0 0.0
  %1774 = vmatmul.mubr.f32.gmra.mrb[0].mxu0 %v1608
  %v1775 = vpop.f32.mrb[0].mxu0
  %v1776 = vadd.f32 %v1597, %v1775
  %v1777 = vpop.f32.mrb[0].mxu0
  %1778 = vmatprep.mubr.f32.mxu0 0.0
  %1779 = vmatmul.mubr.f32.gmra.mrb[0].mxu0 %v1611
  %v1780 = vpop.f32.mrb[0].mxu0
  %v1781 = vadd.f32 %v1597, %v1780
  %v1782 = vpop.f32.mrb[0].mxu0
  %1783 = vmatprep.mubr.f32.mxu0 0.0
  %1784 = vmatmul.mubr.f32.gmra.mrb[0].mxu0 %v1614
  %v1785 = vpop.f32.mrb[0].mxu0
  %v1786 = vadd.f32 %v1597, %v1785
  %v1787 = vpop.f32.mrb[0].mxu0
  %1788 = vmatprep.mubr.f32.mxu0 0.0
  %1789 = vmatmul.mubr.f32.gmra.mrb[0].mxu0 %v1617
  %v1790 = vpop.f32.mrb[0].mxu0
  %v1791 = vadd.f32 %v1597, %v1790
  %v1792 = vpop.f32.mrb[0].mxu0
  %1793 = vmatprep.mubr.f32.mxu0 0.0
  %1794 = vmatmul.mubr.f32.gmra.mrb[0].mxu0 %v1620
  %v1795 = vpop.f32.mrb[0].mxu0
  %v1796 = vadd.f32 %v1597, %v1795
  %v1797 = vpop.f32.mrb[0].mxu0
  %1798 = vmatprep.mubr.f32.mxu0 0.0
  %1799 = vmatmul.mubr.f32.gmra.mrb[0].mxu0 %v1623
  %v1800 = vpop.f32.mrb[0].mxu0
  %v1801 = vadd.f32 %v1597, %v1800
  %v1802 = vpop.f32.mrb[0].mxu0
  %1803 = vmatprep.mubr.f32.mxu0 0.0
  %1804 = vmatmul.mubr.f32.gmra.mrb[0].mxu0 %v1626
  %v1805 = vpop.f32.mrb[0].mxu0
  %v1806 = vadd.f32 %v1597, %v1805
  %v1807 = vpop.f32.mrb[0].mxu0
  %1808 = vmatprep.mubr.f32.mxu0 0.0
  %1809 = vmatmul.mubr.f32.gmra.mrb[0].mxu0 %v1629
  %v1810 = vpop.f32.mrb[0].mxu0
  %v1811 = vadd.f32 %v1597, %v1810
  %v1812 = vpop.f32.mrb[0].mxu0
  %1813 = vmatprep.mubr.f32.mxu0 0.0
  %1814 = vmatmul.mubr.f32.gmra.mrb[0].mxu0 %v1632
  %v1815 = vpop.f32.mrb[0].mxu0
  %v1816 = vadd.f32 %v1597, %v1815
  %v1817 = vpop.f32.mrb[0].mxu0
  %1818 = vmatprep.mubr.f32.mxu0 0.0
  %1819 = vmatmul.mubr.f32.gmra.mrb[0].mxu0 %v1635
  %v1820 = vpop.f32.mrb[0].mxu0
  %v1821 = vadd.f32 %v1597, %v1820
  %v1822 = vpop.f32.mrb[0].mxu0
  %1823 = vmatprep.mubr.f32.mxu0 0.0
  %1824 = vmatmul.mubr.f32.gmra.mrb[0].mxu0 %v1638
  %v1825 = vpop.f32.mrb[0].mxu0
  %v1826 = vadd.f32 %v1597, %v1825
  %v1827 = vpop.f32.mrb[0].mxu0
  %1828 = vmatprep.mubr.f32.mxu0 0.0
  %1829 = vmatmul.mubr.f32.gmra.mrb[0].mxu0 %v1641
  %v1830 = vpop.f32.mrb[0].mxu0
  %v1831 = vadd.f32 %v1597, %v1830
  %v1832 = vpop.f32.mrb[0].mxu0
  %1833 = vmatprep.mubr.f32.mxu0 0.0
  %1834 = vmatmul.mubr.f32.gmra.mrb[0].mxu0 %v1644
  %v1835 = vpop.f32.mrb[0].mxu0
  %v1836 = vadd.f32 %v1597, %v1835
  %v1837 = vpop.f32.mrb[0].mxu0
  %1838 = vmatprep.mubr.f32.mxu0 0.0
  %1839 = vmatmul.mubr.f32.gmra.mrb[0].mxu0 %v1647
  %v1840 = vpop.f32.mrb[0].mxu0
  %v1841 = vadd.f32 %v1597, %v1840
  %v1842 = vpop.f32.mrb[0].mxu0
  %1843 = vmatprep.mubr.f32.mxu0 0.0
  %1844 = vmatmul.mubr.f32.gmra.mrb[0].mxu0 %v1650
  %v1845 = vpop.f32.mrb[0].mxu0
  %v1846 = vadd.f32 %v1597, %v1845
  %v1847 = vpop.f32.mrb[0].mxu0
  %1848 = vmatprep.mubr.f32.mxu0 0.0
  %1849 = vmatmul.mubr.f32.gmra.mrb[0].mxu0 %v1653
  %v1850 = vpop.f32.mrb[0].mxu0
  %v1851 = vadd.f32 %v1597, %v1850
  %v1852 = vpop.f32.mrb[0].mxu0
  %1853 = vmatprep.mubr.f32.mxu0 0.0
  %1854 = vmatmul.mubr.f32.gmra.mrb[0].mxu0 %v1656
  %v1855 = vpop.f32.mrb[0].mxu0
  %v1856 = vadd.f32 %v1597, %v1855
  %v1857 = vpop.f32.mrb[0].mxu0
  %1858 = vmatprep.mubr.f32.mxu0 0.0
  %1859 = vmatmul.mubr.f32.gmra.mrb[0].mxu0 %v1659
  %v1860 = vpop.f32.mrb[0].mxu0
  %v1861 = vadd.f32 %v1597, %v1860
  %v1862 = vpop.f32.mrb[0].mxu0
  %1863 = vmatprep.mubr.f32.mxu0 0.0
  %1864 = vmatmul.mubr.f32.gmra.mrb[0].mxu0 %v1662
  %v1865 = vpop.f32.mrb[0].mxu0
  %v1866 = vadd.f32 %v1597, %v1865
  %v1867 = vpop.f32.mrb[0].mxu0
  %1868 = vmatprep.mubr.f32.mxu0 0.0
  %1869 = vmatmul.mubr.f32.gmra.mrb[0].mxu0 %v1665
  %v1870 = vpop.f32.mrb[0].mxu0
  %v1871 = vadd.f32 %v1597, %v1870
  %v1872 = vpop.f32.mrb[0].mxu0
  %1873 = vmatprep.mubr.f32.mxu0 0.0
  %1874 = vmatmul.mubr.f32.gmra.mrb[0].mxu0 %v1668
  %v1875 = vpop.f32.mrb[0].mxu0
  %v1876 = vadd.f32 %v1597, %v1875
  %v1877 = vpop.f32.mrb[0].mxu0
  %1878 = vmatprep.mubr.f32.mxu0 0.0
  %1879 = vmatmul.mubr.f32.gmra.mrb[0].mxu0 %v1671
  %v1880 = vpop.f32.mrb[0].mxu0
  %v1881 = vadd.f32 %v1597, %v1880
  %v1882 = vpop.f32.mrb[0].mxu0
  %1883 = vmatprep.mubr.f32.mxu0 0.0
  %1884 = vmatmul.mubr.f32.gmra.mrb[0].mxu0 %v1674
  %v1885 = vpop.f32.mrb[0].mxu0
  %v1886 = vadd.f32 %v1597, %v1885
  %v1887 = vpop.f32.mrb[0].mxu0
  %1888 = vmatprep.mubr.f32.mxu0 0.0
  %1889 = vmatmul.mubr.f32.gmra.mrb[0].mxu0 %v1677
  %v1890 = vpop.f32.mrb[0].mxu0
  %v1891 = vadd.f32 %v1597, %v1890
  %v1892 = vpop.f32.mrb[0].mxu0
  %1893 = vmatprep.mubr.f32.mxu0 0.0
  %1894 = vmatmul.mubr.f32.gmra.mrb[0].mxu0 %v1680
  %v1895 = vpop.f32.mrb[0].mxu0
  %v1896 = vadd.f32 %v1597, %v1895
  %v1897 = vpop.f32.mrb[0].mxu0
  %1898 = vmatprep.mubr.f32.mxu0 0.0
  %1899 = vmatmul.mubr.f32.gmra.mrb[0].mxu0 %v1683
  %v1900 = vpop.f32.mrb[0].mxu0
  %v1901 = vadd.f32 %v1597, %v1900
  %v1902 = vpop.f32.mrb[0].mxu0
  %1903 = vmatprep.mubr.f32.mxu0 0.0
  %1904 = vmatmul.mubr.f32.gmra.mrb[0].mxu0 %v1686
  %v1905 = vpop.f32.mrb[0].mxu0
  %v1906 = vadd.f32 %v1597, %v1905
  %v1907 = vpop.f32.mrb[0].mxu0
  %1908 = vmatprep.mubr.f32.mxu0 0.0
  %1909 = vmatmul.mubr.f32.gmra.mrb[0].mxu0 %v1689
  %v1910 = vpop.f32.mrb[0].mxu0
  %v1911 = vadd.f32 %v1597, %v1910
  %v1912 = vpop.f32.mrb[0].mxu0
  %1913 = vmatprep.mubr.f32.mxu0 0.0
  %1914 = vmatmul.mubr.f32.gmra.mrb[0].mxu0 %v1692
  %v1915 = vpop.f32.mrb[0].mxu0
  %v1916 = vadd.f32 %v1597, %v1915
  %v1917 = vpop.f32.mrb[0].mxu0
  %1918 = vdwg.mxu0
  %v1919 = vld [vmem:[%s2] sm:$0xff]
  %v1920 = vpack.c.bf16 %v1766, %v1761
  %v1921 = vpack.c.bf16 %v1776, %v1771
  %v1922 = vpack.c.bf16 %v1786, %v1781
  %v1923 = vpack.c.bf16 %v1796, %v1791
  %v1924 = vpack.c.bf16 %v1806, %v1801
  %v1925 = vpack.c.bf16 %v1816, %v1811
  %v1926 = vpack.c.bf16 %v1826, %v1821
  %v1927 = vpack.c.bf16 %v1836, %v1831
  %v1928 = vpack.c.bf16 %v1846, %v1841
  %v1929 = vpack.c.bf16 %v1856, %v1851
  %v1930 = vpack.c.bf16 %v1866, %v1861
  %v1931 = vpack.c.bf16 %v1876, %v1871
  %v1932 = vpack.c.bf16 %v1886, %v1881
  %v1933 = vpack.c.bf16 %v1896, %v1891
  %v1934 = vpack.c.bf16 %v1906, %v1901
  %v1935 = vpack.c.bf16 %v1916, %v1911
  %v1937 = vunpack.c.l.b16 %v1919
  %v1938 = vunpack.c.h.b16 %v1919
  %v1939 = vpack.c.b16 %v1937, %v1937
  %v1940 = vpack.c.b16 %v1938, %v1938
  %1943 = vmatprep.subr.bf16.mxu0 0
  %1944 = vmatpush1.bf16.msra.mxu0 %v1920
  %1945 = vmatprep.subr.bf16.mxu0 0
  %1946 = vmatpush1.bf16.msra.mxu0 %v1921
  %1947 = vmatprep.subr.bf16.mxu0 0
  %1948 = vmatpush1.bf16.msra.mxu0 %v1922
  %1949 = vmatprep.subr.bf16.mxu0 0
  %1950 = vmatpush1.bf16.msra.mxu0 %v1923
  %1951 = vmatprep.subr.bf16.mxu0 0
  %1952 = vmatpush1.bf16.msra.mxu0 %v1924
  %1953 = vmatprep.subr.bf16.mxu0 0
  %1954 = vmatpush1.bf16.msra.mxu0 %v1925
  %1955 = vmatprep.subr.bf16.mxu0 0
  %1956 = vmatpush1.bf16.msra.mxu0 %v1926
  %1957 = vmatprep.subr.bf16.mxu0 0
  %1958 = vmatpush1.bf16.msra.mxu0 %v1927
  %1959 = vmatprep.subr.bf16.mxu0 0
  %1960 = vmatpush1.bf16.msra.mxu0 %v1928
  %1961 = vmatprep.subr.bf16.mxu0 0
  %1962 = vmatpush1.bf16.msra.mxu0 %v1929
  %1963 = vmatprep.subr.bf16.mxu0 0
  %1964 = vmatpush1.bf16.msra.mxu0 %v1930
  %1965 = vmatprep.subr.bf16.mxu0 0
  %1966 = vmatpush1.bf16.msra.mxu0 %v1931
  %1967 = vmatprep.subr.bf16.mxu0 0
  %1968 = vmatpush1.bf16.msra.mxu0 %v1932
  %1969 = vmatprep.subr.bf16.mxu0 0
  %1970 = vmatpush1.bf16.msra.mxu0 %v1933
  %1971 = vmatprep.subr.bf16.mxu0 0
  %1972 = vmatpush1.bf16.msra.mxu0 %v1934
  %1973 = vmatprep.subr.bf16.mxu0 0
  %1974 = vmatpush1.bf16.msra.mxu0 %v1935
  %1975 = vmatprep.mubr.bf16.mxu0 %v1940
  %1976 = vmatmul.mubr.bf16.gmra.mrb[0].mxu0 %v1939
  %v1977 = vpop.f32.mrb[0].mxu0
  %v1978 = vadd.f32 0.0, %v1977
  %v1979 = vpop.f32.mrb[0].mxu0
  %v1980 = vpop.f32.mrb[0].mxu0
  %v1981 = vpop.f32.mrb[0].mxu0
  %1982 = vdwg.mxu0
  %v1983 = vld [vmem:[%s6] sm:$0xff]
  %v1984 = vld [vmem:[%s6 + $0x8] sm:$0xff]
  %v1985 = vld [vmem:[%s6 + $0x10] sm:$0xff]
  %v1986 = vld [vmem:[%s6 + $0x18] sm:$0xff]
  %v1987 = vld [vmem:[%s6 + $0x20] sm:$0x1]
  %v1988 = vlaneseq
  %v1989 = vshrl.u32 %v1988, 7
  %v1990 = vsub.s32 0, %v1989
  %v1991 = vrot.slane %v1987, %v1990
  %v1993 = vsel %vm1058, %v1978, 0
  %1995 = vmatprep.subr.mxu0 0.0
  %1996 = vmatpush1.msra.mxu0 %v1983
  %1997 = vmatprep.subr.mxu0 0.0
  %1998 = vmatpush1.msra.mxu0 %v1984
  %1999 = vmatprep.subr.mxu0 0.0
  %2000 = vmatpush1.msra.mxu0 %v1985
  %2001 = vmatprep.subr.mxu0 0.0
  %2002 = vmatpush1.msra.mxu0 %v1986
  %2003 = vmatprep.subr.mxu0 0.0
  %2004 = vmatpush1.msra.mxu0 0.0
  %2005 = vmatprep.subr.mxu0 0.0
  %2006 = vmatpush1.msra.mxu0 0.0
  %2007 = vmatprep.subr.mxu0 0.0
  %2008 = vmatpush1.msra.mxu0 0.0
  %2009 = vmatprep.subr.mxu0 0.0
  %2010 = vmatpush1.msra.mxu0 0.0
  %2011 = vmatprep.subr.mxu0 0.0
  %2012 = vmatpush1.msra.mxu0 0.0
  %2013 = vmatprep.subr.mxu0 0.0
  %2014 = vmatpush1.msra.mxu0 0.0
  %2015 = vmatprep.subr.mxu0 0.0
  %2016 = vmatpush1.msra.mxu0 0.0
  %2017 = vmatprep.subr.mxu0 0.0
  %2018 = vmatpush1.msra.mxu0 0.0
  %2019 = vmatprep.subr.mxu0 0.0
  %2020 = vmatpush1.msra.mxu0 0.0
  %2021 = vmatprep.subr.mxu0 0.0
  %2022 = vmatpush1.msra.mxu0 0.0
  %2023 = vmatprep.subr.mxu0 0.0
  %2024 = vmatpush1.msra.mxu0 0.0
  %2025 = vmatprep.subr.mxu0 0.0
  %2026 = vmatpush1.msra.mxu0 0.0
  %2027 = vmatprep.subr.mxu0 0.0
  %2028 = vmatpush1.msra.mxu0 0.0
  %2029 = vmatprep.subr.mxu0 0.0
  %2030 = vmatpush1.msra.mxu0 0.0
  %2031 = vmatprep.subr.mxu0 0.0
  %2032 = vmatpush1.msra.mxu0 0.0
  %2033 = vmatprep.subr.mxu0 0.0
  %2034 = vmatpush1.msra.mxu0 0.0
  %2035 = vmatprep.subr.mxu0 0.0
  %2036 = vmatpush1.msra.mxu0 0.0
  %2037 = vmatprep.subr.mxu0 0.0
  %2038 = vmatpush1.msra.mxu0 0.0
  %2039 = vmatprep.subr.mxu0 0.0
  %2040 = vmatpush1.msra.mxu0 0.0
  %2041 = vmatprep.subr.mxu0 0.0
  %2042 = vmatpush1.msra.mxu0 0.0
  %2043 = vmatprep.subr.mxu0 0.0
  %2044 = vmatpush1.msra.mxu0 0.0
  %2045 = vmatprep.subr.mxu0 0.0
  %2046 = vmatpush1.msra.mxu0 0.0
  %2047 = vmatprep.subr.mxu0 0.0
  %2048 = vmatpush1.msra.mxu0 0.0
  %2049 = vmatprep.subr.mxu0 0.0
  %2050 = vmatpush1.msra.mxu0 0.0
  %2051 = vmatprep.subr.mxu0 0.0
  %2052 = vmatpush1.msra.mxu0 0.0
  %2053 = vmatprep.subr.mxu0 0.0
  %2054 = vmatpush1.msra.mxu0 0.0
  %2055 = vmatprep.subr.mxu0 0.0
  %2056 = vmatpush1.msra.mxu0 0.0
  %2057 = vmatprep.subr.mxu0 0.0
  %2058 = vmatpush1.msra.mxu0 0.0
  %2059 = vmatprep.mubr.f32.mxu0 0.0
  %2060 = vmatmul.mubr.f32.gmra.mrb[0].mxu0 %v1993
  %v2061 = vpop.f32.mrb[0].mxu0
  %v2062 = vadd.f32 %v1991, %v2061
  %v2063 = vpop.f32.mrb[0].mxu0
  %2064 = vdwg.mxu0
  %2065 = vst.msk [vmem:[%s7] sm:$0xff] %vm514, %v2062
  // Predicated region
  $region30: #{tpu_custom_call.1} parent=0 // pred_check
    _
  $region31: #{tpu_custom_call.1} parent=0 // pred_check_branch
    %2067 = sbr.rel (0) target = $region33
  $region32: #{tpu_custom_call.1} parent=0 // pred_region
    _
  $region33: #{tpu_custom_call.1} parent=0 // pred_fallthru
    _
  // Predicated region
  $region34: #{tpu_custom_call.1} parent=0 // pred_check
    _
  $region35: #{tpu_custom_call.1} parent=0 // pred_check_branch
    %2069 = sbr.rel (0) target = $region37
  $region36: #{tpu_custom_call.1} parent=0 // pred_region
    _
  $region37: #{tpu_custom_call.1} parent=0 // pred_fallthru
    _

</llo_original>
